<compile_context>
chip_gen: v7x
topology: tpu7x:2x2x1
jax: 0.10.0
libtpu: 0.0.40
codegen_flags: <defaults>
</compile_context>

<pallas_src>
from functools import partial

import jax
import jax.numpy as jnp
from jax import lax
from jax.experimental import pallas as pl
from jax.experimental.pallas import tpu as pltpu


def _layernorm(x, gamma, beta, eps=1e-5):
    mean = jnp.mean(x, axis=-1, keepdims=True)
    var = jnp.mean((x - mean) ** 2, axis=-1, keepdims=True)
    return (x - mean) * lax.rsqrt(var + eps) * gamma + beta


def _gelu_exact(x):
    # nn.GELU() default (exact, erf-based)
    return 0.5 * x * (1.0 + lax.erf(x * 0.7071067811865476))


def vit_block_kernel(x_ref, g1_ref, b1_ref, wqkv_ref, wo_ref,
                     g2_ref, b2_ref, w1_ref, bb1_ref, w2_ref, bb2_ref,
                     o_ref, ctx_scr, *kv_scratch,
                     n_heads, n_qt, gelu_approx):
    S, D = x_ref.shape[1], x_ref.shape[2]
    tq = o_ref.shape[1]                  # query-tile rows handled by this step
    hd = D // n_heads
    scale = 1.0 / float(hd) ** 0.5
    cdt = wqkv_ref.dtype                 # matmul operand dtype (bf16 or f32)

    if n_qt == 1:
        # Single q-tile: fully fused QKV projection (one MXU matmul, N = 3D).
        x_t = x_ref[0]                                        # (S, D) f32
        xn = _layernorm(x_t, g1_ref[0], b1_ref[0])
        qkv = jnp.dot(xn.astype(cdt), wqkv_ref[...],
                      preferred_element_type=jnp.float32)     # (S, 3D) f32
        q_t = qkv[:, :D] * scale                              # scale folded once
        k = qkv[:, D:2 * D].astype(cdt)
        v = qkv[:, 2 * D:].astype(cdt)
    else:
        # q-tiled: K/V over the full sequence are computed ONCE per batch
        # element (qi == 0) into VMEM scratch and reused for later q-tiles.
        k_scr, v_scr = kv_scratch
        qi = pl.program_id(1)

        @pl.when(qi == 0)
        def _():
            xn_full = _layernorm(x_ref[0], g1_ref[0], b1_ref[0])
            kv = jnp.dot(xn_full.astype(cdt), wqkv_ref[:, D:],
                         preferred_element_type=jnp.float32)  # (S, 2D) f32
            k_scr[...] = kv[:, :D].astype(k_scr.dtype)
            v_scr[...] = kv[:, D:].astype(v_scr.dtype)

        q_start = pl.multiple_of(qi * tq, tq)
        x_t = x_ref[0, pl.ds(q_start, tq), :]                 # (tq, D)
        xn_t = _layernorm(x_t, g1_ref[0], b1_ref[0])
        q_t = jnp.dot(xn_t.astype(cdt), wqkv_ref[:, :D],
                      preferred_element_type=jnp.float32) * scale
        k = k_scr[...]
        v = v_scr[...]

    # ---- multi-head self attention (bias=False) ----
    # Per-head scores + softmax + PV (static unroll, n_heads is small).
    # Heads are written into a (tq, D) scratch at their column slice; the
    # output projection is ONE (tq, D) @ (D, D) matmul after the loop.
    for h in range(n_heads):
        sl = slice(h * hd, (h + 1) * hd)
        qh = q_t[:, sl].astype(cdt)
        kh = k[:, sl]
        vh = v[:, sl]
        s = lax.dot_general(qh, kh, (((1,), (1,)), ((), ())),
                            preferred_element_type=jnp.float32)   # (tq, S)
        s = s - jnp.max(s, axis=-1, keepdims=True)
        p = jnp.exp(s)
        p = p * pl.reciprocal(jnp.sum(p, axis=-1, keepdims=True), approx=True)
        oh = jnp.dot(p.astype(cdt), vh, preferred_element_type=jnp.float32)
        ctx_scr[:, sl] = oh.astype(ctx_scr.dtype)

    ctx = jnp.dot(ctx_scr[...], wo_ref[...],
                  preferred_element_type=jnp.float32)             # (tq, D)

    # ---- residual 1 ----
    out = x_t + ctx

    # ---- norm2 + MLP + residual 2 ----
    on = _layernorm(out, g2_ref[0], b2_ref[0])
    h1 = jnp.dot(on.astype(cdt), w1_ref[...],
                 preferred_element_type=jnp.float32) + bb1_ref[0]
    if gelu_approx:
        h1 = jax.nn.gelu(h1, approximate=True)    # EUP tanh, opt-in
    else:
        h1 = _gelu_exact(h1)                      # matches nn.GELU() default
    h2 = jnp.dot(h1.astype(cdt), w2_ref[...],
                 preferred_element_type=jnp.float32) + bb2_ref[0]

    o_ref[0] = (out + h2).astype(o_ref.dtype)


def vit_block(x, params, n_heads, *, q_block=None, use_bf16_matmul=True,
              gelu_approx=False):
    B, S, D = x.shape
    H = params["w1"].shape[1]
    assert D % n_heads == 0

    # q-tiling default: OFF (n_qt = 1).  On single-TensorCore v5e/v6e a
    # second grid axis only adds per-step overhead; on v7x pass q_block=128
    # explicitly when B == 1 to feed both TensorCores.
    if q_block is None:
        q_block = S
    assert S % q_block == 0, "q_block must divide S (pad/mask not implemented)"
    n_qt = S // q_block

    wdt = jnp.bfloat16 if use_bf16_matmul else x.dtype
    wqkv = jnp.concatenate(
        [params["wq"], params["wk"], params["wv"]], axis=1).astype(wdt)  # (D,3D)
    wo = params["wo"].astype(wdt)
    w1 = params["w1"].astype(wdt)
    w2 = params["w2"].astype(wdt)

    def wspec(shape):
        # Block index is constant across the whole grid -> single-buffer it.
        return pl.BlockSpec(shape, lambda b, qi: (0,) * len(shape),
                            pipeline_mode=pl.Buffered(1))

    in_specs = [
        pl.BlockSpec((1, S, D), lambda b, qi: (b, 0, 0)),    # x (full seq)
        wspec((1, D)), wspec((1, D)),                        # norm1 gamma/beta
        wspec((D, 3 * D)),                                   # fused Wqkv
        wspec((D, D)),                                       # Wo
        wspec((1, D)), wspec((1, D)),                        # norm2 gamma/beta
        wspec((D, H)), wspec((1, H)),                        # mlp W1, b1
        wspec((H, D)), wspec((1, D)),                        # mlp W2, b2
    ]

    scratch_shapes = [pltpu.VMEM((q_block, D), wdt)]         # per-head ctx
    if n_qt > 1:
        scratch_shapes += [pltpu.VMEM((S, D), wdt),          # K cache
                           pltpu.VMEM((S, D), wdt)]          # V cache

    # Explicit VMEM budget: single-buffered weights + double-buffered x/out
    # tiles + scratch + in-flight activations, ~1.4x headroom, capped at
    # 48 MiB so it leaves headroom even on v7x's 64 MiB per-TC VMEM.
    w_item = jnp.dtype(wdt).itemsize
    wb = w_item * (3 * D * D + D * D + D * H + H * D)
    sb = 4 * (4 * D + H + D)
    iob = 4 * (2 * S * D + 2 * q_block * D)
    scr = w_item * (q_block * D + (2 * S * D if n_qt > 1 else 0))
    ab = 4 * (4 * S * D + 2 * q_block * S + 2 * q_block * H + 6 * q_block * D)
    vmem_limit = int(1.4 * (wb + sb + iob + scr + ab)) + (2 << 20)
    vmem_limit = max(min(vmem_limit, 48 << 20), 4 << 20)

    return pl.pallas_call(
        partial(vit_block_kernel, n_heads=n_heads, n_qt=n_qt,
                gelu_approx=gelu_approx),
        out_shape=jax.ShapeDtypeStruct((B, S, D), x.dtype),
        grid=(B, n_qt),
        in_specs=in_specs,
        out_specs=pl.BlockSpec((1, q_block, D), lambda b, qi: (b, qi, 0)),
        scratch_shapes=scratch_shapes,
        compiler_params=pltpu.CompilerParams(
            dimension_semantics=("parallel", "arbitrary"),
            vmem_limit_bytes=vmem_limit),
    )(x, params["g1"], params["b1"], wqkv, wo,
      params["g2"], params["b2"], w1, params["bb1"], w2, params["bb2"])


def make_params(key, D, mlp_ratio=4):
    H = mlp_ratio * D
    ks = jax.random.split(key, 6)
    s = 0.02
    return {
        "g1": jnp.ones((1, D), jnp.float32),
        "b1": jnp.zeros((1, D), jnp.float32),
        # weights already transposed to "x @ W" layout
        "wq": s * jax.random.normal(ks[0], (D, D), jnp.float32),
        "wk": s * jax.random.normal(ks[1], (D, D), jnp.float32),
        "wv": s * jax.random.normal(ks[2], (D, D), jnp.float32),
        "wo": s * jax.random.normal(ks[3], (D, D), jnp.float32),
        "g2": jnp.ones((1, D), jnp.float32),
        "b2": jnp.zeros((1, D), jnp.float32),
        "w1": s * jax.random.normal(ks[4], (D, H), jnp.float32),
        "bb1": jnp.zeros((1, H), jnp.float32),
        "w2": s * jax.random.normal(ks[5], (H, D), jnp.float32),
        "bb2": jnp.zeros((1, D), jnp.float32),
    }


def vit_block_ref(x, p, n_heads):
    """Pure-JAX reference matching the PyTorch forward (fp32)."""
    def ln(v, g, b):
        m = jnp.mean(v, -1, keepdims=True)
        var = jnp.mean((v - m) ** 2, -1, keepdims=True)
        return (v - m) / jnp.sqrt(var + 1e-5) * g + b

    B, S, D = x.shape
    hd = D // n_heads
    xn = ln(x, p["g1"][0], p["b1"][0])
    q = xn @ p["wq"]
    k = xn @ p["wk"]
    v = xn @ p["wv"]
    q = q.reshape(B, S, n_heads, hd).transpose(0, 2, 1, 3)
    k = k.reshape(B, S, n_heads, hd).transpose(0, 2, 1, 3)
    v = v.reshape(B, S, n_heads, hd).transpose(0, 2, 1, 3)
    s = jnp.einsum("bhqd,bhkd->bhqk", q, k) / jnp.sqrt(float(hd))
    pmat = jax.nn.softmax(s, axis=-1)
    attn = jnp.einsum("bhqk,bhkd->bhqd", pmat, v).transpose(0, 2, 1, 3).reshape(B, S, D)
    attn = attn @ p["wo"]
    out = x + attn
    on = ln(out, p["g2"][0], p["b2"][0])
    h1 = on @ p["w1"] + p["bb1"][0]
    h1 = 0.5 * h1 * (1.0 + lax.erf(h1 * 0.7071067811865476))
    h2 = h1 @ p["w2"] + p["bb2"][0]
    return out + h2


if __name__ == "__main__":
    key = jax.random.PRNGKey(0)
    kx, kp, kx2, kp2 = jax.random.split(key, 4)

    # ---- test 1: small shapes, fp32 MXU operands (closest to PyTorch fp32) --
    B, S, D, n_heads = 2, 8, 32, 4
    x = jax.random.normal(kx, (B, S, D), jnp.float32)
    params = make_params(kp, D)
    out_f32 = jax.block_until_ready(
        vit_block(x, params, n_heads, use_bf16_matmul=False))
    ref = vit_block_ref(x, params, n_heads)
    assert out_f32.shape == (B, S, D)
    # Tolerance slightly loosened vs fp32 bit-exactness: softmax denominator
    # uses the (near-fp32-accurate) EUP approximate reciprocal.
    assert jnp.allclose(out_f32, ref, rtol=1e-3, atol=1e-3), "fp32 path mismatch"

    # ---- test 2: same shapes, default bf16 MXU operands (f32 accumulation) --
    out_bf16 = jax.block_until_ready(vit_block(x, params, n_heads))
    assert jnp.allclose(out_bf16, ref, rtol=3e-2, atol=3e-2), "bf16 path mismatch"

    # ---- test 3: q-tiled path (K/V cached in VMEM scratch across q-tiles) ---
    B2, S2, D2, nh2 = 1, 256, 128, 4
    x2 = jax.random.normal(kx2, (B2, S2, D2), jnp.float32)
    params2 = make_params(kp2, D2)
    out_qt = jax.block_until_ready(vit_block(x2, params2, nh2, q_block=128))
    ref2 = vit_block_ref(x2, params2, nh2)
    assert out_qt.shape == (B2, S2, D2)
    assert jnp.allclose(out_qt, ref2, rtol=3e-2, atol=3e-2), "q-tiled path mismatch"

    print("KERNEL_OK")
</pallas_src>

<mosaic_0001>
module attributes {stable_mosaic.version = 11 : i64} {
  func.func @vit_block_kernel(%arg0: i32, %arg1: i32, %arg2: memref<1x8x32xf32, #tpu.memory_space<vmem>>, %arg3: memref<1x32xf32, #tpu.memory_space<vmem>>, %arg4: memref<1x32xf32, #tpu.memory_space<vmem>>, %arg5: memref<32x96xf32, #tpu.memory_space<vmem>>, %arg6: memref<32x32xf32, #tpu.memory_space<vmem>>, %arg7: memref<1x32xf32, #tpu.memory_space<vmem>>, %arg8: memref<1x32xf32, #tpu.memory_space<vmem>>, %arg9: memref<32x128xf32, #tpu.memory_space<vmem>>, %arg10: memref<1x128xf32, #tpu.memory_space<vmem>>, %arg11: memref<128x32xf32, #tpu.memory_space<vmem>>, %arg12: memref<1x32xf32, #tpu.memory_space<vmem>>, %arg13: memref<1x8x32xf32, #tpu.memory_space<vmem>>, %arg14: memref<8x32xf32, #tpu.memory_space<vmem>>) attributes {dimension_semantics = [#tpu.dimension_semantics<parallel>, #tpu.dimension_semantics<arbitrary>], iteration_bounds = array<i64: 2, 1>, scalar_prefetch = 0 : i64, scratch_operands = 1 : i64, tpu.core_type = #tpu.core_type<tc>, window_params = [{transform_indices = @transform_0, window_bounds = array<i64: 1, 8, 32>}, {pipeline_mode = #tpu.pipeline_mode<synchronous>, transform_indices = @transform_1, window_bounds = array<i64: 1, 32>}, {pipeline_mode = #tpu.pipeline_mode<synchronous>, transform_indices = @transform_2, window_bounds = array<i64: 1, 32>}, {pipeline_mode = #tpu.pipeline_mode<synchronous>, transform_indices = @transform_3, window_bounds = array<i64: 32, 96>}, {pipeline_mode = #tpu.pipeline_mode<synchronous>, transform_indices = @transform_4, window_bounds = array<i64: 32, 32>}, {pipeline_mode = #tpu.pipeline_mode<synchronous>, transform_indices = @transform_5, window_bounds = array<i64: 1, 32>}, {pipeline_mode = #tpu.pipeline_mode<synchronous>, transform_indices = @transform_6, window_bounds = array<i64: 1, 32>}, {pipeline_mode = #tpu.pipeline_mode<synchronous>, transform_indices = @transform_7, window_bounds = array<i64: 32, 128>}, {pipeline_mode = #tpu.pipeline_mode<synchronous>, transform_indices = @transform_8, window_bounds = array<i64: 1, 128>}, {pipeline_mode = #tpu.pipeline_mode<synchronous>, transform_indices = @transform_9, window_bounds = array<i64: 128, 32>}, {pipeline_mode = #tpu.pipeline_mode<synchronous>, transform_indices = @transform_10, window_bounds = array<i64: 1, 32>}, {transform_indices = @transform_11, window_bounds = array<i64: 1, 8, 32>}]} {
    %c0 = arith.constant 0 : index
    %c0_0 = arith.constant 0 : index
    %c0_1 = arith.constant 0 : index
    %0 = vector.load %arg2[%c0, %c0_0, %c0_1] : memref<1x8x32xf32, #tpu.memory_space<vmem>>, vector<1x8x32xf32>
    %1 = vector.shape_cast %0 : vector<1x8x32xf32> to vector<8x32xf32>
    %c0_2 = arith.constant 0 : index
    %c0_3 = arith.constant 0 : index
    %2 = vector.load %arg3[%c0_2, %c0_3] : memref<1x32xf32, #tpu.memory_space<vmem>>, vector<1x32xf32>
    %3 = vector.shape_cast %2 : vector<1x32xf32> to vector<32xf32>
    %c0_4 = arith.constant 0 : index
    %c0_5 = arith.constant 0 : index
    %4 = vector.load %arg4[%c0_4, %c0_5] : memref<1x32xf32, #tpu.memory_space<vmem>>, vector<1x32xf32>
    %5 = vector.shape_cast %4 : vector<1x32xf32> to vector<32xf32>
    %cst = arith.constant dense<0.000000e+00> : vector<8xf32>
    %6 = vector.multi_reduction <add>, %1, %cst [1] : vector<8x32xf32> to vector<8xf32>
    %7 = vector.shape_cast %6 : vector<8xf32> to vector<8x1xf32>
    %cst_6 = arith.constant 3.200000e+01 : f32
    %8 = vector.broadcast %cst_6 : f32 to vector<8x1xf32>
    %9 = arith.divf %7, %8 : vector<8x1xf32>
    %10 = vector.broadcast %9 : vector<8x1xf32> to vector<8x32xf32>
    %11 = arith.subf %1, %10 : vector<8x32xf32>
    %12 = arith.mulf %11, %11 : vector<8x32xf32>
    %cst_7 = arith.constant dense<0.000000e+00> : vector<8xf32>
    %13 = vector.multi_reduction <add>, %12, %cst_7 [1] : vector<8x32xf32> to vector<8xf32>
    %14 = vector.shape_cast %13 : vector<8xf32> to vector<8x1xf32>
    %cst_8 = arith.constant 3.200000e+01 : f32
    %15 = vector.broadcast %cst_8 : f32 to vector<8x1xf32>
    %16 = arith.divf %14, %15 : vector<8x1xf32>
    %17 = vector.broadcast %9 : vector<8x1xf32> to vector<8x32xf32>
    %18 = arith.subf %1, %17 : vector<8x32xf32>
    %cst_9 = arith.constant 9.99999974E-6 : f32
    %19 = vector.broadcast %cst_9 : f32 to vector<8x1xf32>
    %20 = arith.addf %16, %19 : vector<8x1xf32>
    %21 = math.rsqrt %20 : vector<8x1xf32>
    %22 = vector.broadcast %21 : vector<8x1xf32> to vector<8x32xf32>
    %23 = arith.mulf %18, %22 : vector<8x32xf32>
    %24 = vector.shape_cast %3 : vector<32xf32> to vector<1x32xf32>
    %25 = vector.broadcast %24 : vector<1x32xf32> to vector<8x32xf32>
    %26 = arith.mulf %23, %25 : vector<8x32xf32>
    %27 = vector.shape_cast %5 : vector<32xf32> to vector<1x32xf32>
    %28 = vector.broadcast %27 : vector<1x32xf32> to vector<8x32xf32>
    %29 = arith.addf %26, %28 : vector<8x32xf32>
    %c0_10 = arith.constant 0 : index
    %c0_11 = arith.constant 0 : index
    %30 = vector.load %arg5[%c0_10, %c0_11] : memref<32x96xf32, #tpu.memory_space<vmem>>, vector<32x96xf32>
    %cst_12 = arith.constant dense<0.000000e+00> : vector<8x96xf32>
    %31 = tpu.matmul %29, %30, %cst_12 {dimension_numbers = #tpu.dot_dimension_numbers<[1], [0], [0], [1], [0, 0, 1, 1], [], []>} : vector<8x32xf32>, vector<32x96xf32>, vector<8x96xf32> -> vector<8x96xf32>
    %32 = vector.extract_strided_slice %31 {offsets = [0, 0], sizes = [8, 32], strides = [1, 1]} : vector<8x96xf32> to vector<8x32xf32>
    %cst_13 = arith.constant 0.353553385 : f32
    %33 = vector.broadcast %cst_13 : f32 to vector<8x32xf32>
    %34 = arith.mulf %32, %33 : vector<8x32xf32>
    %35 = vector.extract_strided_slice %31 {offsets = [0, 32], sizes = [8, 32], strides = [1, 1]} : vector<8x96xf32> to vector<8x32xf32>
    %36 = vector.extract_strided_slice %31 {offsets = [0, 64], sizes = [8, 32], strides = [1, 1]} : vector<8x96xf32> to vector<8x32xf32>
    %37 = vector.extract_strided_slice %34 {offsets = [0, 0], sizes = [8, 8], strides = [1, 1]} : vector<8x32xf32> to vector<8x8xf32>
    %38 = vector.extract_strided_slice %35 {offsets = [0, 0], sizes = [8, 8], strides = [1, 1]} : vector<8x32xf32> to vector<8x8xf32>
    %39 = vector.extract_strided_slice %36 {offsets = [0, 0], sizes = [8, 8], strides = [1, 1]} : vector<8x32xf32> to vector<8x8xf32>
    %cst_14 = arith.constant dense<0.000000e+00> : vector<8x8xf32>
    %40 = tpu.matmul %37, %38, %cst_14 {dimension_numbers = #tpu.dot_dimension_numbers<[1], [1], [0], [0], [0, 0, 1, 0], [], []>} : vector<8x8xf32>, vector<8x8xf32>, vector<8x8xf32> -> vector<8x8xf32>
    %cst_15 = arith.constant dense<0xFF800000> : vector<8xf32>
    %41 = vector.multi_reduction <maximumf>, %40, %cst_15 [1] : vector<8x8xf32> to vector<8xf32>
    %42 = vector.shape_cast %41 : vector<8xf32> to vector<8x1xf32>
    %43 = vector.broadcast %42 : vector<8x1xf32> to vector<8x8xf32>
    %44 = arith.subf %40, %43 : vector<8x8xf32>
    %45 = math.exp %44 : vector<8x8xf32>
    %cst_16 = arith.constant dense<0.000000e+00> : vector<8xf32>
    %46 = vector.multi_reduction <add>, %45, %cst_16 [1] : vector<8x8xf32> to vector<8xf32>
    %47 = vector.shape_cast %46 : vector<8xf32> to vector<8x1xf32>
    %48 = tpu.reciprocal %47 {approx = true} : vector<8x1xf32> -> vector<8x1xf32>
    %49 = vector.broadcast %48 : vector<8x1xf32> to vector<8x8xf32>
    %50 = arith.mulf %45, %49 : vector<8x8xf32>
    %cst_17 = arith.constant dense<0.000000e+00> : vector<8x8xf32>
    %51 = tpu.matmul %50, %39, %cst_17 {dimension_numbers = #tpu.dot_dimension_numbers<[1], [0], [0], [1], [0, 0, 1, 1], [], []>} : vector<8x8xf32>, vector<8x8xf32>, vector<8x8xf32> -> vector<8x8xf32>
    %c0_18 = arith.constant 0 : index
    %c0_19 = arith.constant 0 : index
    %52 = vector.load %arg14[%c0_18, %c0_19] : memref<8x32xf32, #tpu.memory_space<vmem>>, vector<8x8xf32>
    tpu.vector_store %arg14[%c0_18, %c0_19], %51 {strides = array<i32>} : memref<8x32xf32, #tpu.memory_space<vmem>>, vector<8x8xf32>,
    %53 = vector.extract_strided_slice %34 {offsets = [0, 8], sizes = [8, 8], strides = [1, 1]} : vector<8x32xf32> to vector<8x8xf32>
    %54 = vector.extract_strided_slice %35 {offsets = [0, 8], sizes = [8, 8], strides = [1, 1]} : vector<8x32xf32> to vector<8x8xf32>
    %55 = vector.extract_strided_slice %36 {offsets = [0, 8], sizes = [8, 8], strides = [1, 1]} : vector<8x32xf32> to vector<8x8xf32>
    %cst_20 = arith.constant dense<0.000000e+00> : vector<8x8xf32>
    %56 = tpu.matmul %53, %54, %cst_20 {dimension_numbers = #tpu.dot_dimension_numbers<[1], [1], [0], [0], [0, 0, 1, 0], [], []>} : vector<8x8xf32>, vector<8x8xf32>, vector<8x8xf32> -> vector<8x8xf32>
    %cst_21 = arith.constant dense<0xFF800000> : vector<8xf32>
    %57 = vector.multi_reduction <maximumf>, %56, %cst_21 [1] : vector<8x8xf32> to vector<8xf32>
    %58 = vector.shape_cast %57 : vector<8xf32> to vector<8x1xf32>
    %59 = vector.broadcast %58 : vector<8x1xf32> to vector<8x8xf32>
    %60 = arith.subf %56, %59 : vector<8x8xf32>
    %61 = math.exp %60 : vector<8x8xf32>
    %cst_22 = arith.constant dense<0.000000e+00> : vector<8xf32>
    %62 = vector.multi_reduction <add>, %61, %cst_22 [1] : vector<8x8xf32> to vector<8xf32>
    %63 = vector.shape_cast %62 : vector<8xf32> to vector<8x1xf32>
    %64 = tpu.reciprocal %63 {approx = true} : vector<8x1xf32> -> vector<8x1xf32>
    %65 = vector.broadcast %64 : vector<8x1xf32> to vector<8x8xf32>
    %66 = arith.mulf %61, %65 : vector<8x8xf32>
    %cst_23 = arith.constant dense<0.000000e+00> : vector<8x8xf32>
    %67 = tpu.matmul %66, %55, %cst_23 {dimension_numbers = #tpu.dot_dimension_numbers<[1], [0], [0], [1], [0, 0, 1, 1], [], []>} : vector<8x8xf32>, vector<8x8xf32>, vector<8x8xf32> -> vector<8x8xf32>
    %c0_24 = arith.constant 0 : index
    %c8 = arith.constant 8 : index
    %68 = vector.load %arg14[%c0_24, %c8] : memref<8x32xf32, #tpu.memory_space<vmem>>, vector<8x8xf32>
    tpu.vector_store %arg14[%c0_24, %c8], %67 {strides = array<i32>} : memref<8x32xf32, #tpu.memory_space<vmem>>, vector<8x8xf32>,
    %69 = vector.extract_strided_slice %34 {offsets = [0, 16], sizes = [8, 8], strides = [1, 1]} : vector<8x32xf32> to vector<8x8xf32>
    %70 = vector.extract_strided_slice %35 {offsets = [0, 16], sizes = [8, 8], strides = [1, 1]} : vector<8x32xf32> to vector<8x8xf32>
    %71 = vector.extract_strided_slice %36 {offsets = [0, 16], sizes = [8, 8], strides = [1, 1]} : vector<8x32xf32> to vector<8x8xf32>
    %cst_25 = arith.constant dense<0.000000e+00> : vector<8x8xf32>
    %72 = tpu.matmul %69, %70, %cst_25 {dimension_numbers = #tpu.dot_dimension_numbers<[1], [1], [0], [0], [0, 0, 1, 0], [], []>} : vector<8x8xf32>, vector<8x8xf32>, vector<8x8xf32> -> vector<8x8xf32>
    %cst_26 = arith.constant dense<0xFF800000> : vector<8xf32>
    %73 = vector.multi_reduction <maximumf>, %72, %cst_26 [1] : vector<8x8xf32> to vector<8xf32>
    %74 = vector.shape_cast %73 : vector<8xf32> to vector<8x1xf32>
    %75 = vector.broadcast %74 : vector<8x1xf32> to vector<8x8xf32>
    %76 = arith.subf %72, %75 : vector<8x8xf32>
    %77 = math.exp %76 : vector<8x8xf32>
    %cst_27 = arith.constant dense<0.000000e+00> : vector<8xf32>
    %78 = vector.multi_reduction <add>, %77, %cst_27 [1] : vector<8x8xf32> to vector<8xf32>
    %79 = vector.shape_cast %78 : vector<8xf32> to vector<8x1xf32>
    %80 = tpu.reciprocal %79 {approx = true} : vector<8x1xf32> -> vector<8x1xf32>
    %81 = vector.broadcast %80 : vector<8x1xf32> to vector<8x8xf32>
    %82 = arith.mulf %77, %81 : vector<8x8xf32>
    %cst_28 = arith.constant dense<0.000000e+00> : vector<8x8xf32>
    %83 = tpu.matmul %82, %71, %cst_28 {dimension_numbers = #tpu.dot_dimension_numbers<[1], [0], [0], [1], [0, 0, 1, 1], [], []>} : vector<8x8xf32>, vector<8x8xf32>, vector<8x8xf32> -> vector<8x8xf32>
    %c0_29 = arith.constant 0 : index
    %c16 = arith.constant 16 : index
    %84 = vector.load %arg14[%c0_29, %c16] : memref<8x32xf32, #tpu.memory_space<vmem>>, vector<8x8xf32>
    tpu.vector_store %arg14[%c0_29, %c16], %83 {strides = array<i32>} : memref<8x32xf32, #tpu.memory_space<vmem>>, vector<8x8xf32>,
    %85 = vector.extract_strided_slice %34 {offsets = [0, 24], sizes = [8, 8], strides = [1, 1]} : vector<8x32xf32> to vector<8x8xf32>
    %86 = vector.extract_strided_slice %35 {offsets = [0, 24], sizes = [8, 8], strides = [1, 1]} : vector<8x32xf32> to vector<8x8xf32>
    %87 = vector.extract_strided_slice %36 {offsets = [0, 24], sizes = [8, 8], strides = [1, 1]} : vector<8x32xf32> to vector<8x8xf32>
    %cst_30 = arith.constant dense<0.000000e+00> : vector<8x8xf32>
    %88 = tpu.matmul %85, %86, %cst_30 {dimension_numbers = #tpu.dot_dimension_numbers<[1], [1], [0], [0], [0, 0, 1, 0], [], []>} : vector<8x8xf32>, vector<8x8xf32>, vector<8x8xf32> -> vector<8x8xf32>
    %cst_31 = arith.constant dense<0xFF800000> : vector<8xf32>
    %89 = vector.multi_reduction <maximumf>, %88, %cst_31 [1] : vector<8x8xf32> to vector<8xf32>
    %90 = vector.shape_cast %89 : vector<8xf32> to vector<8x1xf32>
    %91 = vector.broadcast %90 : vector<8x1xf32> to vector<8x8xf32>
    %92 = arith.subf %88, %91 : vector<8x8xf32>
    %93 = math.exp %92 : vector<8x8xf32>
    %cst_32 = arith.constant dense<0.000000e+00> : vector<8xf32>
    %94 = vector.multi_reduction <add>, %93, %cst_32 [1] : vector<8x8xf32> to vector<8xf32>
    %95 = vector.shape_cast %94 : vector<8xf32> to vector<8x1xf32>
    %96 = tpu.reciprocal %95 {approx = true} : vector<8x1xf32> -> vector<8x1xf32>
    %97 = vector.broadcast %96 : vector<8x1xf32> to vector<8x8xf32>
    %98 = arith.mulf %93, %97 : vector<8x8xf32>
    %cst_33 = arith.constant dense<0.000000e+00> : vector<8x8xf32>
    %99 = tpu.matmul %98, %87, %cst_33 {dimension_numbers = #tpu.dot_dimension_numbers<[1], [0], [0], [1], [0, 0, 1, 1], [], []>} : vector<8x8xf32>, vector<8x8xf32>, vector<8x8xf32> -> vector<8x8xf32>
    %c0_34 = arith.constant 0 : index
    %c24 = arith.constant 24 : index
    %100 = vector.load %arg14[%c0_34, %c24] : memref<8x32xf32, #tpu.memory_space<vmem>>, vector<8x8xf32>
    tpu.vector_store %arg14[%c0_34, %c24], %99 {strides = array<i32>} : memref<8x32xf32, #tpu.memory_space<vmem>>, vector<8x8xf32>,
    %c0_35 = arith.constant 0 : index
    %c0_36 = arith.constant 0 : index
    %101 = vector.load %arg14[%c0_35, %c0_36] : memref<8x32xf32, #tpu.memory_space<vmem>>, vector<8x32xf32>
    %c0_37 = arith.constant 0 : index
    %c0_38 = arith.constant 0 : index
    %102 = vector.load %arg6[%c0_37, %c0_38] : memref<32x32xf32, #tpu.memory_space<vmem>>, vector<32x32xf32>
    %cst_39 = arith.constant dense<0.000000e+00> : vector<8x32xf32>
    %103 = tpu.matmul %101, %102, %cst_39 {dimension_numbers = #tpu.dot_dimension_numbers<[1], [0], [0], [1], [0, 0, 1, 1], [], []>} : vector<8x32xf32>, vector<32x32xf32>, vector<8x32xf32> -> vector<8x32xf32>
    %104 = arith.addf %1, %103 : vector<8x32xf32>
    %c0_40 = arith.constant 0 : index
    %c0_41 = arith.constant 0 : index
    %105 = vector.load %arg7[%c0_40, %c0_41] : memref<1x32xf32, #tpu.memory_space<vmem>>, vector<1x32xf32>
    %106 = vector.shape_cast %105 : vector<1x32xf32> to vector<32xf32>
    %c0_42 = arith.constant 0 : index
    %c0_43 = arith.constant 0 : index
    %107 = vector.load %arg8[%c0_42, %c0_43] : memref<1x32xf32, #tpu.memory_space<vmem>>, vector<1x32xf32>
    %108 = vector.shape_cast %107 : vector<1x32xf32> to vector<32xf32>
    %cst_44 = arith.constant dense<0.000000e+00> : vector<8xf32>
    %109 = vector.multi_reduction <add>, %104, %cst_44 [1] : vector<8x32xf32> to vector<8xf32>
    %110 = vector.shape_cast %109 : vector<8xf32> to vector<8x1xf32>
    %cst_45 = arith.constant 3.200000e+01 : f32
    %111 = vector.broadcast %cst_45 : f32 to vector<8x1xf32>
    %112 = arith.divf %110, %111 : vector<8x1xf32>
    %113 = vector.broadcast %112 : vector<8x1xf32> to vector<8x32xf32>
    %114 = arith.subf %104, %113 : vector<8x32xf32>
    %115 = arith.mulf %114, %114 : vector<8x32xf32>
    %cst_46 = arith.constant dense<0.000000e+00> : vector<8xf32>
    %116 = vector.multi_reduction <add>, %115, %cst_46 [1] : vector<8x32xf32> to vector<8xf32>
    %117 = vector.shape_cast %116 : vector<8xf32> to vector<8x1xf32>
    %cst_47 = arith.constant 3.200000e+01 : f32
    %118 = vector.broadcast %cst_47 : f32 to vector<8x1xf32>
    %119 = arith.divf %117, %118 : vector<8x1xf32>
    %120 = vector.broadcast %112 : vector<8x1xf32> to vector<8x32xf32>
    %121 = arith.subf %104, %120 : vector<8x32xf32>
    %cst_48 = arith.constant 9.99999974E-6 : f32
    %122 = vector.broadcast %cst_48 : f32 to vector<8x1xf32>
    %123 = arith.addf %119, %122 : vector<8x1xf32>
    %124 = math.rsqrt %123 : vector<8x1xf32>
    %125 = vector.broadcast %124 : vector<8x1xf32> to vector<8x32xf32>
    %126 = arith.mulf %121, %125 : vector<8x32xf32>
    %127 = vector.shape_cast %106 : vector<32xf32> to vector<1x32xf32>
    %128 = vector.broadcast %127 : vector<1x32xf32> to vector<8x32xf32>
    %129 = arith.mulf %126, %128 : vector<8x32xf32>
    %130 = vector.shape_cast %108 : vector<32xf32> to vector<1x32xf32>
    %131 = vector.broadcast %130 : vector<1x32xf32> to vector<8x32xf32>
    %132 = arith.addf %129, %131 : vector<8x32xf32>
    %c0_49 = arith.constant 0 : index
    %c0_50 = arith.constant 0 : index
    %133 = vector.load %arg9[%c0_49, %c0_50] : memref<32x128xf32, #tpu.memory_space<vmem>>, vector<32x128xf32>
    %cst_51 = arith.constant dense<0.000000e+00> : vector<8x128xf32>
    %134 = tpu.matmul %132, %133, %cst_51 {dimension_numbers = #tpu.dot_dimension_numbers<[1], [0], [0], [1], [0, 0, 1, 1], [], []>} : vector<8x32xf32>, vector<32x128xf32>, vector<8x128xf32> -> vector<8x128xf32>
    %c0_52 = arith.constant 0 : index
    %c0_53 = arith.constant 0 : index
    %135 = vector.load %arg10[%c0_52, %c0_53] : memref<1x128xf32, #tpu.memory_space<vmem>>, vector<1x128xf32>
    %136 = vector.shape_cast %135 : vector<1x128xf32> to vector<128xf32>
    %137 = vector.shape_cast %136 : vector<128xf32> to vector<1x128xf32>
    %138 = vector.broadcast %137 : vector<1x128xf32> to vector<8x128xf32>
    %139 = arith.addf %134, %138 : vector<8x128xf32>
    %cst_54 = arith.constant 5.000000e-01 : f32
    %140 = vector.broadcast %cst_54 : f32 to vector<8x128xf32>
    %141 = arith.mulf %140, %139 : vector<8x128xf32>
    %cst_55 = arith.constant 0.707106769 : f32
    %142 = vector.broadcast %cst_55 : f32 to vector<8x128xf32>
    %143 = arith.mulf %139, %142 : vector<8x128xf32>
    %144 = math.erf %143 : vector<8x128xf32>
    %cst_56 = arith.constant 1.000000e+00 : f32
    %145 = vector.broadcast %cst_56 : f32 to vector<8x128xf32>
    %146 = arith.addf %145, %144 : vector<8x128xf32>
    %147 = arith.mulf %141, %146 : vector<8x128xf32>
    %c0_57 = arith.constant 0 : index
    %c0_58 = arith.constant 0 : index
    %148 = vector.load %arg11[%c0_57, %c0_58] : memref<128x32xf32, #tpu.memory_space<vmem>>, vector<128x32xf32>
    %cst_59 = arith.constant dense<0.000000e+00> : vector<8x32xf32>
    %149 = tpu.matmul %147, %148, %cst_59 {dimension_numbers = #tpu.dot_dimension_numbers<[1], [0], [0], [1], [0, 0, 1, 1], [], []>} : vector<8x128xf32>, vector<128x32xf32>, vector<8x32xf32> -> vector<8x32xf32>
    %c0_60 = arith.constant 0 : index
    %c0_61 = arith.constant 0 : index
    %150 = vector.load %arg12[%c0_60, %c0_61] : memref<1x32xf32, #tpu.memory_space<vmem>>, vector<1x32xf32>
    %151 = vector.shape_cast %150 : vector<1x32xf32> to vector<32xf32>
    %152 = vector.shape_cast %151 : vector<32xf32> to vector<1x32xf32>
    %153 = vector.broadcast %152 : vector<1x32xf32> to vector<8x32xf32>
    %154 = arith.addf %149, %153 : vector<8x32xf32>
    %155 = arith.addf %104, %154 : vector<8x32xf32>
    %c0_62 = arith.constant 0 : index
    %c0_63 = arith.constant 0 : index
    %c0_64 = arith.constant 0 : index
    %156 = vector.load %arg13[%c0_62, %c0_63, %c0_64] : memref<1x8x32xf32, #tpu.memory_space<vmem>>, vector<1x8x32xf32>
    %157 = vector.shape_cast %156 : vector<1x8x32xf32> to vector<8x32xf32>
    %158 = vector.shape_cast %155 : vector<8x32xf32> to vector<1x8x32xf32>
    tpu.vector_store %arg13[%c0_62, %c0_63, %c0_64], %158 {strides = array<i32>} : memref<1x8x32xf32, #tpu.memory_space<vmem>>, vector<1x8x32xf32>,
    return
  }
  func.func @transform_0(%arg0: i32, %arg1: i32) -> (i32, i32, i32) {
    %c0_i32 = arith.constant 0 : i32
    %c0_i32_0 = arith.constant 0 : i32
    %c0_i32_1 = arith.constant 0 : i32
    return %arg0, %c0_i32, %c0_i32_0 : i32, i32, i32
  }
  func.func @transform_1(%arg0: i32, %arg1: i32) -> (i32, i32) {
    %c0_i32 = arith.constant 0 : i32
    %c0_i32_0 = arith.constant 0 : i32
    %c0_i32_1 = arith.constant 0 : i32
    return %c0_i32, %c0_i32_0 : i32, i32
  }
  func.func @transform_2(%arg0: i32, %arg1: i32) -> (i32, i32) {
    %c0_i32 = arith.constant 0 : i32
    %c0_i32_0 = arith.constant 0 : i32
    %c0_i32_1 = arith.constant 0 : i32
    return %c0_i32, %c0_i32_0 : i32, i32
  }
  func.func @transform_3(%arg0: i32, %arg1: i32) -> (i32, i32) {
    %c0_i32 = arith.constant 0 : i32
    %c0_i32_0 = arith.constant 0 : i32
    %c0_i32_1 = arith.constant 0 : i32
    return %c0_i32, %c0_i32_0 : i32, i32
  }
  func.func @transform_4(%arg0: i32, %arg1: i32) -> (i32, i32) {
    %c0_i32 = arith.constant 0 : i32
    %c0_i32_0 = arith.constant 0 : i32
    %c0_i32_1 = arith.constant 0 : i32
    return %c0_i32, %c0_i32_0 : i32, i32
  }
  func.func @transform_5(%arg0: i32, %arg1: i32) -> (i32, i32) {
    %c0_i32 = arith.constant 0 : i32
    %c0_i32_0 = arith.constant 0 : i32
    %c0_i32_1 = arith.constant 0 : i32
    return %c0_i32, %c0_i32_0 : i32, i32
  }
  func.func @transform_6(%arg0: i32, %arg1: i32) -> (i32, i32) {
    %c0_i32 = arith.constant 0 : i32
    %c0_i32_0 = arith.constant 0 : i32
    %c0_i32_1 = arith.constant 0 : i32
    return %c0_i32, %c0_i32_0 : i32, i32
  }
  func.func @transform_7(%arg0: i32, %arg1: i32) -> (i32, i32) {
    %c0_i32 = arith.constant 0 : i32
    %c0_i32_0 = arith.constant 0 : i32
    %c0_i32_1 = arith.constant 0 : i32
    return %c0_i32, %c0_i32_0 : i32, i32
  }
  func.func @transform_8(%arg0: i32, %arg1: i32) -> (i32, i32) {
    %c0_i32 = arith.constant 0 : i32
    %c0_i32_0 = arith.constant 0 : i32
    %c0_i32_1 = arith.constant 0 : i32
    return %c0_i32, %c0_i32_0 : i32, i32
  }
  func.func @transform_9(%arg0: i32, %arg1: i32) -> (i32, i32) {
    %c0_i32 = arith.constant 0 : i32
    %c0_i32_0 = arith.constant 0 : i32
    %c0_i32_1 = arith.constant 0 : i32
    return %c0_i32, %c0_i32_0 : i32, i32
  }
  func.func @transform_10(%arg0: i32, %arg1: i32) -> (i32, i32) {
    %c0_i32 = arith.constant 0 : i32
    %c0_i32_0 = arith.constant 0 : i32
    %c0_i32_1 = arith.constant 0 : i32
    return %c0_i32, %c0_i32_0 : i32, i32
  }
  func.func @transform_11(%arg0: i32, %arg1: i32) -> (i32, i32, i32) {
    %c0_i32 = arith.constant 0 : i32
    %c0_i32_0 = arith.constant 0 : i32
    return %arg0, %arg1, %c0_i32 : i32, i32, i32
  }
}

</mosaic_0001>

<llo_original>
// kernel: tpu_custom_call.1
$region0: #{tpu_custom_call.1}
  #allocation0 [shape = 'u32[]', space=smem, size = 0x4, offset = 0x4, fixed_abs, tag = 'smem constant byte address 0x4 - core index']
  #allocation1 [shape = 'u32[144,128]{1,0:T(1,128)}', space=vmem, size = 0x12000, scoped, tag = 'internal scratch']
  #allocation2 [shape = 'f32[8,32]{1,0:T(8,128)}', space=vmem, size = 0x1000, scoped, tag = 'scratch operand']
  %s0 = inlined_call_operand.vmem [shape: f32[2,8,32], index: 0, kind: input, shape index: {}]
  %s1 = inlined_call_operand.vmem [shape: f32[1,32], index: 1, kind: input, shape index: {}]
  %s2 = inlined_call_operand.vmem [shape: f32[1,32], index: 2, kind: input, shape index: {}]
  %s3 = inlined_call_operand.vmem [shape: f32[32,96], index: 3, kind: input, shape index: {}]
  %s4 = inlined_call_operand.vmem [shape: f32[32,32], index: 4, kind: input, shape index: {}]
  %s5 = inlined_call_operand.vmem [shape: f32[1,32], index: 5, kind: input, shape index: {}]
  %s6 = inlined_call_operand.vmem [shape: f32[1,32], index: 6, kind: input, shape index: {}]
  %s7 = inlined_call_operand.vmem [shape: f32[32,128], index: 7, kind: input, shape index: {}]
  %s8 = inlined_call_operand.vmem [shape: f32[1,128], index: 8, kind: input, shape index: {}]
  %s9 = inlined_call_operand.vmem [shape: f32[128,32], index: 9, kind: input, shape index: {}]
  %s10 = inlined_call_operand.vmem [shape: f32[1,32], index: 10, kind: input, shape index: {}]
  %s11 = inlined_call_operand.hbm [shape: f32[2,8,32], index: 11, kind: output, shape index: {}]
  %s12 = sld [smem:[#allocation0]]
  $region77: #{tpu_custom_call.1} parent=0
    _
  %s14 = ssub.s32 1, %s12
  %s15 = scalar_select 0, %s14, %s12
  $region1: #{tpu_custom_call.1} parent=0
    #allocation3 [shape = 'u8[8192]{0}', space=vmem, size = 0x2000, scoped, tag = 'output window, operand 0']
    #allocation4 [shape = 's32[2]{0}', space=sflag, size = 0x8, scoped, tag = 'scoped memory for tpu_custom_call.1']
    %16 = vsyncpa [#allocation4], 0
    %s17 = scalar_lea.sflag [#allocation4], 1
    %18 = vsyncpa %s17, 0
    loop: start=0, step=1, limit=4
    $region2: #{tpu_custom_call.1} parent=1 // loop_pre_header
      _
    $region3: #{tpu_custom_call.1} parent=1 // loop_header
      %s20 = sphi 0, %s24
      %p21 = scmp.ge.s32.totalorder %s20, 4
      %s27 = sphi 0, %s39
      %s28 = sphi 0, %s35
      %s29 = sphi 0, %s27
      %s30 = sphi 0, %s28
      %s31 = sphi 0, %s29
      %s32 = sphi 0, %s30
      %s42 = sphi 0, %s44
      %s45 = sphi 0, %s42
      %s46 = sphi 0, %s45
      %s62 = sphi 0, %s46
      %s66 = sphi 0, %s66
      %s68 = sphi 0, %s66
      %s69 = sphi 0, %s68
      %s83 = sphi 0, %s69
      %s87 = sphi 0, %s87
      %s89 = sphi 0, %s87
      %s90 = sphi 0, %s89
      %s104 = sphi 0, %s90
      %s108 = sphi 0, %s108
      %s110 = sphi 0, %s108
      %s111 = sphi 0, %s110
      %s125 = sphi 0, %s111
      %s129 = sphi 0, %s129
      %s131 = sphi 0, %s129
      %s132 = sphi 0, %s131
      %s146 = sphi 0, %s132
      %s150 = sphi 0, %s150
      %s152 = sphi 0, %s150
      %s153 = sphi 0, %s152
      %s167 = sphi 0, %s153
      %s171 = sphi 0, %s171
      %s173 = sphi 0, %s171
      %s174 = sphi 0, %s173
      %s188 = sphi 0, %s174
      %s192 = sphi 0, %s192
      %s194 = sphi 0, %s192
      %s195 = sphi 0, %s194
      %s209 = sphi 0, %s195
      %s213 = sphi 0, %s213
      %s215 = sphi 0, %s213
      %s216 = sphi 0, %s215
      %s230 = sphi 0, %s216
      %s234 = sphi 0, %s234
      %s236 = sphi 0, %s234
      %s237 = sphi 0, %s236
      %s251 = sphi 0, %s237
      %s255 = sphi 0, %s255
      %s257 = sphi 0, %s255
      %s258 = sphi 0, %s257
      %s272 = sphi 0, %s258
      %s280 = sphi 0, %s282
      %s283 = sphi 0, %s280
      %s284 = sphi 0, %s283
      %s300 = sphi 0, %s284
    $region4: #{tpu_custom_call.1} parent=1 // loop_header_branch
      %23 = sbr.rel (%p21) target = $region8
    $region5: #{tpu_custom_call.1} parent=1 // loop_body
      %s25 = ssub.s32 %s20, 1
      %s26 = ssub.s32 %s20, 2
      %s33 = sadd.s32 1, %s28
      %p34 = scmp.ge.s32.totalorder %s33, 1
      %s35 = scalar_select %p34, 0, %s33
      %s36 = sadd.s32 1, %s27
      %s37 = scalar_select %p34, %s36, %s27
      %p38 = scmp.ge.s32.totalorder %s37, 2
      %s39 = scalar_select %p38, 0, %s37
      %s40 = ssub.s32 %s27, %s39
      %p41 = scmp.eq.s32.totalorder %s40, 0
      %s43 = sadd.s32 %s42, 1
      %s44 = scalar_select %p41, %s42, %s43
      %p47 = pneg %p41
      %p48 = scmp.eq.s32.totalorder %s20, 1
      %p49 = por %p47, %p48
      %p50 = scmp.ne.s32.totalorder %s42, %s45
      %p51 = scmp.eq.s32.totalorder %s20, 0
      %p52 = por %p50, %p51
      %p53 = scmp.ne.s32.totalorder %s42, %s45
      %p54 = scmp.eq.s32.totalorder %s25, 1
      %p55 = por %p53, %p54
      %p56 = scmp.ne.s32.totalorder %s45, %s46
      %p57 = scmp.eq.s32.totalorder %s25, 0
      %p58 = por %p56, %p57
      %p59 = scmp.ne.s32.totalorder %s45, %s46
      %p60 = scmp.eq.s32.totalorder %s26, 1
      %p61 = por %p59, %p60
      %p63 = scmp.ne.s32.totalorder %s46, %s62
      %p64 = scmp.eq.s32.totalorder %s26, 0
      %p65 = por %p63, %p64
      %s67 = sadd.s32 %s66, 1
      %p70 = scmp.eq.s32.totalorder %s20, 1
      %p71 = scmp.ne.s32.totalorder %s66, %s68
      %p72 = scmp.eq.s32.totalorder %s20, 0
      %p73 = por %p71, %p72
      %p74 = scmp.ne.s32.totalorder %s66, %s68
      %p75 = scmp.eq.s32.totalorder %s25, 1
      %p76 = por %p74, %p75
      %p77 = scmp.ne.s32.totalorder %s68, %s69
      %p78 = scmp.eq.s32.totalorder %s25, 0
      %p79 = por %p77, %p78
      %p80 = scmp.ne.s32.totalorder %s68, %s69
      %p81 = scmp.eq.s32.totalorder %s26, 1
      %p82 = por %p80, %p81
      %p84 = scmp.ne.s32.totalorder %s69, %s83
      %p85 = scmp.eq.s32.totalorder %s26, 0
      %p86 = por %p84, %p85
      %s88 = sadd.s32 %s87, 1
      %p91 = scmp.eq.s32.totalorder %s20, 1
      %p92 = scmp.ne.s32.totalorder %s87, %s89
      %p93 = scmp.eq.s32.totalorder %s20, 0
      %p94 = por %p92, %p93
      %p95 = scmp.ne.s32.totalorder %s87, %s89
      %p96 = scmp.eq.s32.totalorder %s25, 1
      %p97 = por %p95, %p96
      %p98 = scmp.ne.s32.totalorder %s89, %s90
      %p99 = scmp.eq.s32.totalorder %s25, 0
      %p100 = por %p98, %p99
      %p101 = scmp.ne.s32.totalorder %s89, %s90
      %p102 = scmp.eq.s32.totalorder %s26, 1
      %p103 = por %p101, %p102
      %p105 = scmp.ne.s32.totalorder %s90, %s104
      %p106 = scmp.eq.s32.totalorder %s26, 0
      %p107 = por %p105, %p106
      %s109 = sadd.s32 %s108, 1
      %p112 = scmp.eq.s32.totalorder %s20, 1
      %p113 = scmp.ne.s32.totalorder %s108, %s110
      %p114 = scmp.eq.s32.totalorder %s20, 0
      %p115 = por %p113, %p114
      %p116 = scmp.ne.s32.totalorder %s108, %s110
      %p117 = scmp.eq.s32.totalorder %s25, 1
      %p118 = por %p116, %p117
      %p119 = scmp.ne.s32.totalorder %s110, %s111
      %p120 = scmp.eq.s32.totalorder %s25, 0
      %p121 = por %p119, %p120
      %p122 = scmp.ne.s32.totalorder %s110, %s111
      %p123 = scmp.eq.s32.totalorder %s26, 1
      %p124 = por %p122, %p123
      %p126 = scmp.ne.s32.totalorder %s111, %s125
      %p127 = scmp.eq.s32.totalorder %s26, 0
      %p128 = por %p126, %p127
      %s130 = sadd.s32 %s129, 1
      %p133 = scmp.eq.s32.totalorder %s20, 1
      %p134 = scmp.ne.s32.totalorder %s129, %s131
      %p135 = scmp.eq.s32.totalorder %s20, 0
      %p136 = por %p134, %p135
      %p137 = scmp.ne.s32.totalorder %s129, %s131
      %p138 = scmp.eq.s32.totalorder %s25, 1
      %p139 = por %p137, %p138
      %p140 = scmp.ne.s32.totalorder %s131, %s132
      %p141 = scmp.eq.s32.totalorder %s25, 0
      %p142 = por %p140, %p141
      %p143 = scmp.ne.s32.totalorder %s131, %s132
      %p144 = scmp.eq.s32.totalorder %s26, 1
      %p145 = por %p143, %p144
      %p147 = scmp.ne.s32.totalorder %s132, %s146
      %p148 = scmp.eq.s32.totalorder %s26, 0
      %p149 = por %p147, %p148
      %s151 = sadd.s32 %s150, 1
      %p154 = scmp.eq.s32.totalorder %s20, 1
      %p155 = scmp.ne.s32.totalorder %s150, %s152
      %p156 = scmp.eq.s32.totalorder %s20, 0
      %p157 = por %p155, %p156
      %p158 = scmp.ne.s32.totalorder %s150, %s152
      %p159 = scmp.eq.s32.totalorder %s25, 1
      %p160 = por %p158, %p159
      %p161 = scmp.ne.s32.totalorder %s152, %s153
      %p162 = scmp.eq.s32.totalorder %s25, 0
      %p163 = por %p161, %p162
      %p164 = scmp.ne.s32.totalorder %s152, %s153
      %p165 = scmp.eq.s32.totalorder %s26, 1
      %p166 = por %p164, %p165
      %p168 = scmp.ne.s32.totalorder %s153, %s167
      %p169 = scmp.eq.s32.totalorder %s26, 0
      %p170 = por %p168, %p169
      %s172 = sadd.s32 %s171, 1
      %p175 = scmp.eq.s32.totalorder %s20, 1
      %p176 = scmp.ne.s32.totalorder %s171, %s173
      %p177 = scmp.eq.s32.totalorder %s20, 0
      %p178 = por %p176, %p177
      %p179 = scmp.ne.s32.totalorder %s171, %s173
      %p180 = scmp.eq.s32.totalorder %s25, 1
      %p181 = por %p179, %p180
      %p182 = scmp.ne.s32.totalorder %s173, %s174
      %p183 = scmp.eq.s32.totalorder %s25, 0
      %p184 = por %p182, %p183
      %p185 = scmp.ne.s32.totalorder %s173, %s174
      %p186 = scmp.eq.s32.totalorder %s26, 1
      %p187 = por %p185, %p186
      %p189 = scmp.ne.s32.totalorder %s174, %s188
      %p190 = scmp.eq.s32.totalorder %s26, 0
      %p191 = por %p189, %p190
      %s193 = sadd.s32 %s192, 1
      %p196 = scmp.eq.s32.totalorder %s20, 1
      %p197 = scmp.ne.s32.totalorder %s192, %s194
      %p198 = scmp.eq.s32.totalorder %s20, 0
      %p199 = por %p197, %p198
      %p200 = scmp.ne.s32.totalorder %s192, %s194
      %p201 = scmp.eq.s32.totalorder %s25, 1
      %p202 = por %p200, %p201
      %p203 = scmp.ne.s32.totalorder %s194, %s195
      %p204 = scmp.eq.s32.totalorder %s25, 0
      %p205 = por %p203, %p204
      %p206 = scmp.ne.s32.totalorder %s194, %s195
      %p207 = scmp.eq.s32.totalorder %s26, 1
      %p208 = por %p206, %p207
      %p210 = scmp.ne.s32.totalorder %s195, %s209
      %p211 = scmp.eq.s32.totalorder %s26, 0
      %p212 = por %p210, %p211
      %s214 = sadd.s32 %s213, 1
      %p217 = scmp.eq.s32.totalorder %s20, 1
      %p218 = scmp.ne.s32.totalorder %s213, %s215
      %p219 = scmp.eq.s32.totalorder %s20, 0
      %p220 = por %p218, %p219
      %p221 = scmp.ne.s32.totalorder %s213, %s215
      %p222 = scmp.eq.s32.totalorder %s25, 1
      %p223 = por %p221, %p222
      %p224 = scmp.ne.s32.totalorder %s215, %s216
      %p225 = scmp.eq.s32.totalorder %s25, 0
      %p226 = por %p224, %p225
      %p227 = scmp.ne.s32.totalorder %s215, %s216
      %p228 = scmp.eq.s32.totalorder %s26, 1
      %p229 = por %p227, %p228
      %p231 = scmp.ne.s32.totalorder %s216, %s230
      %p232 = scmp.eq.s32.totalorder %s26, 0
      %p233 = por %p231, %p232
      %s235 = sadd.s32 %s234, 1
      %p238 = scmp.eq.s32.totalorder %s20, 1
      %p239 = scmp.ne.s32.totalorder %s234, %s236
      %p240 = scmp.eq.s32.totalorder %s20, 0
      %p241 = por %p239, %p240
      %p242 = scmp.ne.s32.totalorder %s234, %s236
      %p243 = scmp.eq.s32.totalorder %s25, 1
      %p244 = por %p242, %p243
      %p245 = scmp.ne.s32.totalorder %s236, %s237
      %p246 = scmp.eq.s32.totalorder %s25, 0
      %p247 = por %p245, %p246
      %p248 = scmp.ne.s32.totalorder %s236, %s237
      %p249 = scmp.eq.s32.totalorder %s26, 1
      %p250 = por %p248, %p249
      %p252 = scmp.ne.s32.totalorder %s237, %s251
      %p253 = scmp.eq.s32.totalorder %s26, 0
      %p254 = por %p252, %p253
      %s256 = sadd.s32 %s255, 1
      %p259 = scmp.eq.s32.totalorder %s20, 1
      %p260 = scmp.ne.s32.totalorder %s255, %s257
      %p261 = scmp.eq.s32.totalorder %s20, 0
      %p262 = por %p260, %p261
      %p263 = scmp.ne.s32.totalorder %s255, %s257
      %p264 = scmp.eq.s32.totalorder %s25, 1
      %p265 = por %p263, %p264
      %p266 = scmp.ne.s32.totalorder %s257, %s258
      %p267 = scmp.eq.s32.totalorder %s25, 0
      %p268 = por %p266, %p267
      %p269 = scmp.ne.s32.totalorder %s257, %s258
      %p270 = scmp.eq.s32.totalorder %s26, 1
      %p271 = por %p269, %p270
      %p273 = scmp.ne.s32.totalorder %s258, %s272
      %p274 = scmp.eq.s32.totalorder %s26, 0
      %p275 = por %p273, %p274
      %s276 = ssub.s32 %s27, %s39
      %s277 = ssub.s32 %s28, %s35
      %s278 = sor.u32 %s276, %s277
      %p279 = scmp.eq.s32.totalorder %s278, 0
      %s281 = sadd.s32 %s280, 1
      %s282 = scalar_select %p279, %s280, %s281
      %p285 = pneg %p279
      %p286 = scmp.eq.s32.totalorder %s20, 1
      %p287 = por %p285, %p286
      %p288 = scmp.ne.s32.totalorder %s280, %s283
      %p289 = scmp.eq.s32.totalorder %s20, 0
      %p290 = por %p288, %p289
      %p291 = scmp.ne.s32.totalorder %s280, %s283
      %p292 = scmp.eq.s32.totalorder %s25, 1
      %p293 = por %p291, %p292
      %p294 = scmp.ne.s32.totalorder %s283, %s284
      %p295 = scmp.eq.s32.totalorder %s25, 0
      %p296 = por %p294, %p295
      %p297 = scmp.ne.s32.totalorder %s283, %s284
      %p298 = scmp.eq.s32.totalorder %s26, 1
      %p299 = por %p297, %p298
      %p301 = scmp.ne.s32.totalorder %s284, %s300
      %p302 = scmp.eq.s32.totalorder %s26, 0
      %p303 = por %p301, %p302
      %p304 = scmp.le.s32.totalorder 1, %s20
      %p305 = scmp.lt.s32.totalorder %s20, 3
      %p306 = pnand %p304, %p305
      %p307 = pneg %p306
      // Predicated region
      $region9: #{tpu_custom_call.1} parent=5 // pred_check
        _
      $region10: #{tpu_custom_call.1} parent=5 // pred_check_branch
        %309 = sbr.rel (%p306) target = $region12
      $region11: #{tpu_custom_call.1} parent=5 // pred_region
        %s310 = ssub.s32 %s20, 1
        // Predicated region
        $region13: #{tpu_custom_call.1} parent=11 // pred_check
          %p311 = pneg %p79
        $region14: #{tpu_custom_call.1} parent=11 // pred_check_branch
          %313 = sbr.rel (%p311) target = $region16
        $region15: #{tpu_custom_call.1} parent=11 // pred_region
          _
        $region16: #{tpu_custom_call.1} parent=11 // pred_fallthru
          _
        // Predicated region
        $region17: #{tpu_custom_call.1} parent=11 // pred_check
          %p314 = pneg %p100
        $region18: #{tpu_custom_call.1} parent=11 // pred_check_branch
          %316 = sbr.rel (%p314) target = $region20
        $region19: #{tpu_custom_call.1} parent=11 // pred_region
          _
        $region20: #{tpu_custom_call.1} parent=11 // pred_fallthru
          _
        // Predicated region
        $region21: #{tpu_custom_call.1} parent=11 // pred_check
          %p317 = pneg %p121
        $region22: #{tpu_custom_call.1} parent=11 // pred_check_branch
          %319 = sbr.rel (%p317) target = $region24
        $region23: #{tpu_custom_call.1} parent=11 // pred_region
          _
        $region24: #{tpu_custom_call.1} parent=11 // pred_fallthru
          _
        // Predicated region
        $region25: #{tpu_custom_call.1} parent=11 // pred_check
          %p320 = pneg %p142
        $region26: #{tpu_custom_call.1} parent=11 // pred_check_branch
          %322 = sbr.rel (%p320) target = $region28
        $region27: #{tpu_custom_call.1} parent=11 // pred_region
          _
        $region28: #{tpu_custom_call.1} parent=11 // pred_fallthru
          _
        // Predicated region
        $region29: #{tpu_custom_call.1} parent=11 // pred_check
          %p323 = pneg %p163
        $region30: #{tpu_custom_call.1} parent=11 // pred_check_branch
          %325 = sbr.rel (%p323) target = $region32
        $region31: #{tpu_custom_call.1} parent=11 // pred_region
          _
        $region32: #{tpu_custom_call.1} parent=11 // pred_fallthru
          _
        // Predicated region
        $region33: #{tpu_custom_call.1} parent=11 // pred_check
          %p326 = pneg %p184
        $region34: #{tpu_custom_call.1} parent=11 // pred_check_branch
          %328 = sbr.rel (%p326) target = $region36
        $region35: #{tpu_custom_call.1} parent=11 // pred_region
          _
        $region36: #{tpu_custom_call.1} parent=11 // pred_fallthru
          _
        // Predicated region
        $region37: #{tpu_custom_call.1} parent=11 // pred_check
          %p329 = pneg %p205
        $region38: #{tpu_custom_call.1} parent=11 // pred_check_branch
          %331 = sbr.rel (%p329) target = $region40
        $region39: #{tpu_custom_call.1} parent=11 // pred_region
          _
        $region40: #{tpu_custom_call.1} parent=11 // pred_fallthru
          _
        // Predicated region
        $region41: #{tpu_custom_call.1} parent=11 // pred_check
          %p332 = pneg %p226
        $region42: #{tpu_custom_call.1} parent=11 // pred_check_branch
          %334 = sbr.rel (%p332) target = $region44
        $region43: #{tpu_custom_call.1} parent=11 // pred_region
          _
        $region44: #{tpu_custom_call.1} parent=11 // pred_fallthru
          _
        // Predicated region
        $region45: #{tpu_custom_call.1} parent=11 // pred_check
          %p335 = pneg %p247
        $region46: #{tpu_custom_call.1} parent=11 // pred_check_branch
          %337 = sbr.rel (%p335) target = $region48
        $region47: #{tpu_custom_call.1} parent=11 // pred_region
          _
        $region48: #{tpu_custom_call.1} parent=11 // pred_fallthru
          _
        // Predicated region
        $region49: #{tpu_custom_call.1} parent=11 // pred_check
          %p338 = pneg %p268
        $region50: #{tpu_custom_call.1} parent=11 // pred_check_branch
          %340 = sbr.rel (%p338) target = $region52
        $region51: #{tpu_custom_call.1} parent=11 // pred_region
          _
        $region52: #{tpu_custom_call.1} parent=11 // pred_fallthru
          _
      $region12: #{tpu_custom_call.1} parent=5 // pred_fallthru
        _
      %p341 = scmp.lt.s32.totalorder %s20, 2
      // Predicated region
      $region53: #{tpu_custom_call.1} parent=5 // pred_check
        %p342 = pneg %p341
      $region54: #{tpu_custom_call.1} parent=5 // pred_check_branch
        %344 = sbr.rel (%p342) target = $region56
      $region55: #{tpu_custom_call.1} parent=5 // pred_region
        // Predicated region
        $region57: #{tpu_custom_call.1} parent=55 // pred_check
          %p345 = pneg %p52
        $region58: #{tpu_custom_call.1} parent=55 // pred_check_branch
          %347 = sbr.rel (%p345) target = $region60
        $region59: #{tpu_custom_call.1} parent=55 // pred_region
          %p348 = scmp.lt.s32.totalorder %s27, 1
          %s349 = scalar_select %p348, %s27, 1
          %s350 = smul.addr %s349, 8
          %s351 = scalar_lea.vmem %s0, %s350
        $region60: #{tpu_custom_call.1} parent=55 // pred_fallthru
          _
      $region56: #{tpu_custom_call.1} parent=5 // pred_fallthru
        _
      %p352 = scmp.le.s32.totalorder 1, %s20
      %p353 = scmp.lt.s32.totalorder %s20, 3
      %p354 = pnand %p352, %p353
      %p355 = pneg %p354
      // Predicated region
      $region61: #{tpu_custom_call.1} parent=5 // pred_check
        _
      $region62: #{tpu_custom_call.1} parent=5 // pred_check_branch
        %357 = sbr.rel (%p354) target = $region64
      $region63: #{tpu_custom_call.1} parent=5 // pred_region
        %s358 = ssub.s32 %s20, 1
        %p359 = scmp.lt.s32.totalorder %s29, 1
        %s360 = scalar_select %p359, %s29, 1
        %s361 = smul.addr %s360, 8
        %s362 = scalar_lea.vmem %s0, %s361
        %p363 = pneg %p58
        %p364 = pneg %p55
        %p365 = pneg %p79
        %p366 = pneg %p76
        %p367 = pneg %p100
        %p368 = pneg %p97
        %p369 = pneg %p121
        %p370 = pneg %p118
        %p371 = pneg %p142
        %p372 = pneg %p139
        %p373 = pneg %p163
        %p374 = pneg %p160
        %p375 = pneg %p184
        %p376 = pneg %p181
        %p377 = pneg %p205
        %p378 = pneg %p202
        %p379 = pneg %p226
        %p380 = pneg %p223
        %p381 = pneg %p247
        %p382 = pneg %p244
        %p383 = pneg %p268
        %p384 = pneg %p265
        %p385 = pneg %p296
        %p386 = pneg %p293
        %s387 = sand.u32 %s283, 1
        %s388 = scalar_lea.sflag [#allocation4], %s387
        %s389 = sand.u32 %s283, 1
        %s390 = smul.addr %s389, 8
        %s391 = scalar_lea.vmem [#allocation3], %s390
        %p392 = scmp.lt.s32.totalorder %s29, 1
        %s393 = scalar_select %p392, %s29, 1
        %s394 = smul.addr %s393, 8
        %s395 = scalar_lea.vmem %s0, %s394
        %v396 = vld [vmem:[%s395] sm:$0xff]
        %v397 = vld [vmem:[%s1] sm:$0x1]
        %v398 = vld [vmem:[%s2] sm:$0x1]
        %vm399 = vcmask 261120
        %v400 = vsel %vm399, %v396, 0.0
        %401 = vadd.xlane.f32.xlu0 %v400
        %v402 = vpop.xlane.xlu0 %401
        %v403 = vrcp.pop 32.0
        %v404 = vmul.f32 %v402, %v403
        %v405 = vsub.f32 %v396, %v404
        %v406 = vmul.f32 %v405, %v405
        %v407 = vsel %vm399, %v406, 0.0
        %408 = vadd.xlane.f32.xlu0 %v407
        %v409 = vpop.xlane.xlu0 %408
        %v410 = vmul.f32 %v409, %v403
        %v411 = vadd.f32 %v410, 1e-05
        %v412 = vrsqrt.pop %v411
        %v413 = vmul.f32 %v405, %v412
        %v415 = vlaneseq
        %v416 = vshrl.u32 %v415, 7
        %v417 = vsub.s32 0, %v416
        %v418 = vrot.slane %v397, %v417
        %v420 = vmul.f32 %v413, %v418
        %v422 = vlaneseq
        %v423 = vshrl.u32 %v422, 7
        %v424 = vsub.s32 0, %v423
        %v425 = vrot.slane %v398, %v424
        %v427 = vadd.f32 %v420, %v425
        %v428 = vld [vmem:[%s3] sm:$0xff]
        %v429 = vld [vmem:[%s3 + $0x8] sm:$0xff]
        %v430 = vld [vmem:[%s3 + $0x10] sm:$0xff]
        %v431 = vld [vmem:[%s3 + $0x18] sm:$0xff]
        %v433 = vsel %vm399, %v427, 0
        %435 = vmatprep.subr.mxu0 0.0
        %436 = vmatpush1.msra.mxu0 %v428
        %437 = vmatprep.subr.mxu0 0.0
        %438 = vmatpush1.msra.mxu0 %v429
        %439 = vmatprep.subr.mxu0 0.0
        %440 = vmatpush1.msra.mxu0 %v430
        %441 = vmatprep.subr.mxu0 0.0
        %442 = vmatpush1.msra.mxu0 %v431
        %443 = vmatprep.subr.mxu0 0.0
        %444 = vmatpush1.msra.mxu0 0.0
        %445 = vmatprep.subr.mxu0 0.0
        %446 = vmatpush1.msra.mxu0 0.0
        %447 = vmatprep.subr.mxu0 0.0
        %448 = vmatpush1.msra.mxu0 0.0
        %449 = vmatprep.subr.mxu0 0.0
        %450 = vmatpush1.msra.mxu0 0.0
        %451 = vmatprep.subr.mxu0 0.0
        %452 = vmatpush1.msra.mxu0 0.0
        %453 = vmatprep.subr.mxu0 0.0
        %454 = vmatpush1.msra.mxu0 0.0
        %455 = vmatprep.subr.mxu0 0.0
        %456 = vmatpush1.msra.mxu0 0.0
        %457 = vmatprep.subr.mxu0 0.0
        %458 = vmatpush1.msra.mxu0 0.0
        %459 = vmatprep.subr.mxu0 0.0
        %460 = vmatpush1.msra.mxu0 0.0
        %461 = vmatprep.subr.mxu0 0.0
        %462 = vmatpush1.msra.mxu0 0.0
        %463 = vmatprep.subr.mxu0 0.0
        %464 = vmatpush1.msra.mxu0 0.0
        %465 = vmatprep.subr.mxu0 0.0
        %466 = vmatpush1.msra.mxu0 0.0
        %467 = vmatprep.subr.mxu0 0.0
        %468 = vmatpush1.msra.mxu0 0.0
        %469 = vmatprep.subr.mxu0 0.0
        %470 = vmatpush1.msra.mxu0 0.0
        %471 = vmatprep.subr.mxu0 0.0
        %472 = vmatpush1.msra.mxu0 0.0
        %473 = vmatprep.subr.mxu0 0.0
        %474 = vmatpush1.msra.mxu0 0.0
        %475 = vmatprep.subr.mxu0 0.0
        %476 = vmatpush1.msra.mxu0 0.0
        %477 = vmatprep.subr.mxu0 0.0
        %478 = vmatpush1.msra.mxu0 0.0
        %479 = vmatprep.subr.mxu0 0.0
        %480 = vmatpush1.msra.mxu0 0.0
        %481 = vmatprep.subr.mxu0 0.0
        %482 = vmatpush1.msra.mxu0 0.0
        %483 = vmatprep.subr.mxu0 0.0
        %484 = vmatpush1.msra.mxu0 0.0
        %485 = vmatprep.subr.mxu0 0.0
        %486 = vmatpush1.msra.mxu0 0.0
        %487 = vmatprep.subr.mxu0 0.0
        %488 = vmatpush1.msra.mxu0 0.0
        %489 = vmatprep.subr.mxu0 0.0
        %490 = vmatpush1.msra.mxu0 0.0
        %491 = vmatprep.subr.mxu0 0.0
        %492 = vmatpush1.msra.mxu0 0.0
        %493 = vmatprep.subr.mxu0 0.0
        %494 = vmatpush1.msra.mxu0 0.0
        %495 = vmatprep.subr.mxu0 0.0
        %496 = vmatpush1.msra.mxu0 0.0
        %497 = vmatprep.subr.mxu0 0.0
        %498 = vmatpush1.msra.mxu0 0.0
        %499 = vmatprep.mubr.f32.mxu0 0.0
        %500 = vmatmul.mubr.f32.gmra.mrb[0].mxu0 %v433
        %v501 = vpop.f32.mrb[0].mxu0
        %v502 = vadd.f32 0.0, %v501
        %v503 = vpop.f32.mrb[0].mxu0
        %504 = vdwg.mxu0
        %v505 = vmul.f32 %v502, 0.35355338
        %507 = vrot.lane.b32.xlu0 %v502, 96
        %v508 = vpop.permute.xlu0 %507
        %vm509 = vcmask 64512
        %v511 = vsel %vm509, %v505, 0
        %v513 = vsel %vm509, %v508, 0
        %515 = vmatprep.subr.mxu0 0.0
        %516 = vmatpush1.xpose.msra.mxu0 %v513
        %517 = vmatprep.subr.mxu0 0.0
        %518 = vmatpush1.xpose.msra.mxu0 0.0
        %519 = vmatprep.subr.mxu0 0.0
        %520 = vmatpush1.xpose.msra.mxu0 0.0
        %521 = vmatprep.subr.mxu0 0.0
        %522 = vmatpush1.xpose.msra.mxu0 0.0
        %523 = vmatprep.subr.mxu0 0.0
        %524 = vmatpush1.xpose.msra.mxu0 0.0
        %525 = vmatprep.subr.mxu0 0.0
        %526 = vmatpush1.xpose.msra.mxu0 0.0
        %527 = vmatprep.subr.mxu0 0.0
        %528 = vmatpush1.xpose.msra.mxu0 0.0
        %529 = vmatprep.subr.mxu0 0.0
        %530 = vmatpush1.xpose.msra.mxu0 0.0
        %531 = vmatprep.subr.mxu0 0.0
        %532 = vmatpush1.xpose.msra.mxu0 0.0
        %533 = vmatprep.subr.mxu0 0.0
        %534 = vmatpush1.xpose.msra.mxu0 0.0
        %535 = vmatprep.subr.mxu0 0.0
        %536 = vmatpush1.xpose.msra.mxu0 0.0
        %537 = vmatprep.subr.mxu0 0.0
        %538 = vmatpush1.xpose.msra.mxu0 0.0
        %539 = vmatprep.subr.mxu0 0.0
        %540 = vmatpush1.xpose.msra.mxu0 0.0
        %541 = vmatprep.subr.mxu0 0.0
        %542 = vmatpush1.xpose.msra.mxu0 0.0
        %543 = vmatprep.subr.mxu0 0.0
        %544 = vmatpush1.xpose.msra.mxu0 0.0
        %545 = vmatprep.subr.mxu0 0.0
        %546 = vmatpush1.xpose.msra.mxu0 0.0
        %547 = vmatprep.subr.mxu0 0.0
        %548 = vmatpush1.xpose.msra.mxu0 0.0
        %549 = vmatprep.subr.mxu0 0.0
        %550 = vmatpush1.xpose.msra.mxu0 0.0
        %551 = vmatprep.subr.mxu0 0.0
        %552 = vmatpush1.xpose.msra.mxu0 0.0
        %553 = vmatprep.subr.mxu0 0.0
        %554 = vmatpush1.xpose.msra.mxu0 0.0
        %555 = vmatprep.subr.mxu0 0.0
        %556 = vmatpush1.xpose.msra.mxu0 0.0
        %557 = vmatprep.subr.mxu0 0.0
        %558 = vmatpush1.xpose.msra.mxu0 0.0
        %559 = vmatprep.subr.mxu0 0.0
        %560 = vmatpush1.xpose.msra.mxu0 0.0
        %561 = vmatprep.subr.mxu0 0.0
        %562 = vmatpush1.xpose.msra.mxu0 0.0
        %563 = vmatprep.subr.mxu0 0.0
        %564 = vmatpush1.xpose.msra.mxu0 0.0
        %565 = vmatprep.subr.mxu0 0.0
        %566 = vmatpush1.xpose.msra.mxu0 0.0
        %567 = vmatprep.subr.mxu0 0.0
        %568 = vmatpush1.xpose.msra.mxu0 0.0
        %569 = vmatprep.subr.mxu0 0.0
        %570 = vmatpush1.xpose.msra.mxu0 0.0
        %571 = vmatprep.subr.mxu0 0.0
        %572 = vmatpush1.xpose.msra.mxu0 0.0
        %573 = vmatprep.subr.mxu0 0.0
        %574 = vmatpush1.xpose.msra.mxu0 0.0
        %575 = vmatprep.subr.mxu0 0.0
        %576 = vmatpush1.xpose.msra.mxu0 0.0
        %577 = vmatprep.subr.mxu0 0.0
        %578 = vmatpush1.xpose.msra.mxu0 0.0
        %579 = vmatprep.mubr.f32.mxu0 0.0
        %580 = vmatmul.mubr.f32.gmra.mrb[0].mxu0 %v511
        %v581 = vpop.f32.mrb[0].mxu0
        %v582 = vadd.f32 0.0, %v581
        %v583 = vpop.f32.mrb[0].mxu0
        %584 = vdwg.mxu0
        %v585 = vsel %vm509, %v582, -inf
        %586 = vmax.xlane.f32.xlu0 %v585
        %v587 = vpop.xlane.xlu0 %586
        %v588 = vsub.f32 %v582, %v587
        %v589 = vmul.f32 %v588, 1.442695
        %v590 = vpow.pop %v589
        %v591 = vsel %vm509, %v590, 0.0
        %592 = vadd.xlane.f32.xlu0 %v591
        %v593 = vpop.xlane.xlu0 %592
        %v594 = vrcp.pop %v593
        %v595 = vmul.f32 %v590, %v594
        %596 = vrot.lane.b32.xlu0 %v502, 64
        %v597 = vpop.permute.xlu0 %596
        %v600 = vsel %vm509, %v595, 0
        %602 = vmatprep.subr.mxu0 0.0
        %603 = vmatpush1.msra.mxu0 %v597
        %604 = vmatprep.subr.mxu0 0.0
        %605 = vmatpush1.msra.mxu0 0.0
        %606 = vmatprep.subr.mxu0 0.0
        %607 = vmatpush1.msra.mxu0 0.0
        %608 = vmatprep.subr.mxu0 0.0
        %609 = vmatpush1.msra.mxu0 0.0
        %610 = vmatprep.subr.mxu0 0.0
        %611 = vmatpush1.msra.mxu0 0.0
        %612 = vmatprep.subr.mxu0 0.0
        %613 = vmatpush1.msra.mxu0 0.0
        %614 = vmatprep.subr.mxu0 0.0
        %615 = vmatpush1.msra.mxu0 0.0
        %616 = vmatprep.subr.mxu0 0.0
        %617 = vmatpush1.msra.mxu0 0.0
        %618 = vmatprep.subr.mxu0 0.0
        %619 = vmatpush1.msra.mxu0 0.0
        %620 = vmatprep.subr.mxu0 0.0
        %621 = vmatpush1.msra.mxu0 0.0
        %622 = vmatprep.subr.mxu0 0.0
        %623 = vmatpush1.msra.mxu0 0.0
        %624 = vmatprep.subr.mxu0 0.0
        %625 = vmatpush1.msra.mxu0 0.0
        %626 = vmatprep.subr.mxu0 0.0
        %627 = vmatpush1.msra.mxu0 0.0
        %628 = vmatprep.subr.mxu0 0.0
        %629 = vmatpush1.msra.mxu0 0.0
        %630 = vmatprep.subr.mxu0 0.0
        %631 = vmatpush1.msra.mxu0 0.0
        %632 = vmatprep.subr.mxu0 0.0
        %633 = vmatpush1.msra.mxu0 0.0
        %634 = vmatprep.subr.mxu0 0.0
        %635 = vmatpush1.msra.mxu0 0.0
        %636 = vmatprep.subr.mxu0 0.0
        %637 = vmatpush1.msra.mxu0 0.0
        %638 = vmatprep.subr.mxu0 0.0
        %639 = vmatpush1.msra.mxu0 0.0
        %640 = vmatprep.subr.mxu0 0.0
        %641 = vmatpush1.msra.mxu0 0.0
        %642 = vmatprep.subr.mxu0 0.0
        %643 = vmatpush1.msra.mxu0 0.0
        %644 = vmatprep.subr.mxu0 0.0
        %645 = vmatpush1.msra.mxu0 0.0
        %646 = vmatprep.subr.mxu0 0.0
        %647 = vmatpush1.msra.mxu0 0.0
        %648 = vmatprep.subr.mxu0 0.0
        %649 = vmatpush1.msra.mxu0 0.0
        %650 = vmatprep.subr.mxu0 0.0
        %651 = vmatpush1.msra.mxu0 0.0
        %652 = vmatprep.subr.mxu0 0.0
        %653 = vmatpush1.msra.mxu0 0.0
        %654 = vmatprep.subr.mxu0 0.0
        %655 = vmatpush1.msra.mxu0 0.0
        %656 = vmatprep.subr.mxu0 0.0
        %657 = vmatpush1.msra.mxu0 0.0
        %658 = vmatprep.subr.mxu0 0.0
        %659 = vmatpush1.msra.mxu0 0.0
        %660 = vmatprep.subr.mxu0 0.0
        %661 = vmatpush1.msra.mxu0 0.0
        %662 = vmatprep.subr.mxu0 0.0
        %663 = vmatpush1.msra.mxu0 0.0
        %664 = vmatprep.subr.mxu0 0.0
        %665 = vmatpush1.msra.mxu0 0.0
        %666 = vmatprep.mubr.f32.mxu0 0.0
        %667 = vmatmul.mubr.f32.gmra.mrb[0].mxu0 %v600
        %v668 = vpop.f32.mrb[0].mxu0
        %v669 = vadd.f32 0.0, %v668
        %v670 = vpop.f32.mrb[0].mxu0
        %671 = vdwg.mxu0
        %672 = vst.msk [vmem:[#allocation2] sm:$0xff] %vm509, %v669
        %673 = vrot.lane.b32.xlu0 %v505, 120
        %v674 = vpop.permute.xlu0 %673
        %675 = vrot.lane.b32.xlu0 %v502, 88
        %v676 = vpop.permute.xlu0 %675
        %v677 = vsel %vm509, %v674, 0
        %v679 = vsel %vm509, %v676, 0
        %681 = vmatprep.subr.mxu0 0.0
        %682 = vmatpush1.xpose.msra.mxu0 %v679
        %683 = vmatprep.subr.mxu0 0.0
        %684 = vmatpush1.xpose.msra.mxu0 0.0
        %685 = vmatprep.subr.mxu0 0.0
        %686 = vmatpush1.xpose.msra.mxu0 0.0
        %687 = vmatprep.subr.mxu0 0.0
        %688 = vmatpush1.xpose.msra.mxu0 0.0
        %689 = vmatprep.subr.mxu0 0.0
        %690 = vmatpush1.xpose.msra.mxu0 0.0
        %691 = vmatprep.subr.mxu0 0.0
        %692 = vmatpush1.xpose.msra.mxu0 0.0
        %693 = vmatprep.subr.mxu0 0.0
        %694 = vmatpush1.xpose.msra.mxu0 0.0
        %695 = vmatprep.subr.mxu0 0.0
        %696 = vmatpush1.xpose.msra.mxu0 0.0
        %697 = vmatprep.subr.mxu0 0.0
        %698 = vmatpush1.xpose.msra.mxu0 0.0
        %699 = vmatprep.subr.mxu0 0.0
        %700 = vmatpush1.xpose.msra.mxu0 0.0
        %701 = vmatprep.subr.mxu0 0.0
        %702 = vmatpush1.xpose.msra.mxu0 0.0
        %703 = vmatprep.subr.mxu0 0.0
        %704 = vmatpush1.xpose.msra.mxu0 0.0
        %705 = vmatprep.subr.mxu0 0.0
        %706 = vmatpush1.xpose.msra.mxu0 0.0
        %707 = vmatprep.subr.mxu0 0.0
        %708 = vmatpush1.xpose.msra.mxu0 0.0
        %709 = vmatprep.subr.mxu0 0.0
        %710 = vmatpush1.xpose.msra.mxu0 0.0
        %711 = vmatprep.subr.mxu0 0.0
        %712 = vmatpush1.xpose.msra.mxu0 0.0
        %713 = vmatprep.subr.mxu0 0.0
        %714 = vmatpush1.xpose.msra.mxu0 0.0
        %715 = vmatprep.subr.mxu0 0.0
        %716 = vmatpush1.xpose.msra.mxu0 0.0
        %717 = vmatprep.subr.mxu0 0.0
        %718 = vmatpush1.xpose.msra.mxu0 0.0
        %719 = vmatprep.subr.mxu0 0.0
        %720 = vmatpush1.xpose.msra.mxu0 0.0
        %721 = vmatprep.subr.mxu0 0.0
        %722 = vmatpush1.xpose.msra.mxu0 0.0
        %723 = vmatprep.subr.mxu0 0.0
        %724 = vmatpush1.xpose.msra.mxu0 0.0
        %725 = vmatprep.subr.mxu0 0.0
        %726 = vmatpush1.xpose.msra.mxu0 0.0
        %727 = vmatprep.subr.mxu0 0.0
        %728 = vmatpush1.xpose.msra.mxu0 0.0
        %729 = vmatprep.subr.mxu0 0.0
        %730 = vmatpush1.xpose.msra.mxu0 0.0
        %731 = vmatprep.subr.mxu0 0.0
        %732 = vmatpush1.xpose.msra.mxu0 0.0
        %733 = vmatprep.subr.mxu0 0.0
        %734 = vmatpush1.xpose.msra.mxu0 0.0
        %735 = vmatprep.subr.mxu0 0.0
        %736 = vmatpush1.xpose.msra.mxu0 0.0
        %737 = vmatprep.subr.mxu0 0.0
        %738 = vmatpush1.xpose.msra.mxu0 0.0
        %739 = vmatprep.subr.mxu0 0.0
        %740 = vmatpush1.xpose.msra.mxu0 0.0
        %741 = vmatprep.subr.mxu0 0.0
        %742 = vmatpush1.xpose.msra.mxu0 0.0
        %743 = vmatprep.subr.mxu0 0.0
        %744 = vmatpush1.xpose.msra.mxu0 0.0
        %745 = vmatprep.mubr.f32.mxu0 0.0
        %746 = vmatmul.mubr.f32.gmra.mrb[0].mxu0 %v677
        %v747 = vpop.f32.mrb[0].mxu0
        %v748 = vadd.f32 0.0, %v747
        %v749 = vpop.f32.mrb[0].mxu0
        %750 = vdwg.mxu0
        %v751 = vsel %vm509, %v748, -inf
        %752 = vmax.xlane.f32.xlu0 %v751
        %v753 = vpop.xlane.xlu0 %752
        %v754 = vsub.f32 %v748, %v753
        %v755 = vmul.f32 %v754, 1.442695
        %v756 = vpow.pop %v755
        %v757 = vsel %vm509, %v756, 0.0
        %758 = vadd.xlane.f32.xlu0 %v757
        %v759 = vpop.xlane.xlu0 %758
        %v760 = vrcp.pop %v759
        %v761 = vmul.f32 %v756, %v760
        %762 = vrot.lane.b32.xlu0 %v502, 56
        %v763 = vpop.permute.xlu0 %762
        %v766 = vsel %vm509, %v761, 0
        %768 = vmatprep.subr.mxu0 0.0
        %769 = vmatpush1.msra.mxu0 %v763
        %770 = vmatprep.subr.mxu0 0.0
        %771 = vmatpush1.msra.mxu0 0.0
        %772 = vmatprep.subr.mxu0 0.0
        %773 = vmatpush1.msra.mxu0 0.0
        %774 = vmatprep.subr.mxu0 0.0
        %775 = vmatpush1.msra.mxu0 0.0
        %776 = vmatprep.subr.mxu0 0.0
        %777 = vmatpush1.msra.mxu0 0.0
        %778 = vmatprep.subr.mxu0 0.0
        %779 = vmatpush1.msra.mxu0 0.0
        %780 = vmatprep.subr.mxu0 0.0
        %781 = vmatpush1.msra.mxu0 0.0
        %782 = vmatprep.subr.mxu0 0.0
        %783 = vmatpush1.msra.mxu0 0.0
        %784 = vmatprep.subr.mxu0 0.0
        %785 = vmatpush1.msra.mxu0 0.0
        %786 = vmatprep.subr.mxu0 0.0
        %787 = vmatpush1.msra.mxu0 0.0
        %788 = vmatprep.subr.mxu0 0.0
        %789 = vmatpush1.msra.mxu0 0.0
        %790 = vmatprep.subr.mxu0 0.0
        %791 = vmatpush1.msra.mxu0 0.0
        %792 = vmatprep.subr.mxu0 0.0
        %793 = vmatpush1.msra.mxu0 0.0
        %794 = vmatprep.subr.mxu0 0.0
        %795 = vmatpush1.msra.mxu0 0.0
        %796 = vmatprep.subr.mxu0 0.0
        %797 = vmatpush1.msra.mxu0 0.0
        %798 = vmatprep.subr.mxu0 0.0
        %799 = vmatpush1.msra.mxu0 0.0
        %800 = vmatprep.subr.mxu0 0.0
        %801 = vmatpush1.msra.mxu0 0.0
        %802 = vmatprep.subr.mxu0 0.0
        %803 = vmatpush1.msra.mxu0 0.0
        %804 = vmatprep.subr.mxu0 0.0
        %805 = vmatpush1.msra.mxu0 0.0
        %806 = vmatprep.subr.mxu0 0.0
        %807 = vmatpush1.msra.mxu0 0.0
        %808 = vmatprep.subr.mxu0 0.0
        %809 = vmatpush1.msra.mxu0 0.0
        %810 = vmatprep.subr.mxu0 0.0
        %811 = vmatpush1.msra.mxu0 0.0
        %812 = vmatprep.subr.mxu0 0.0
        %813 = vmatpush1.msra.mxu0 0.0
        %814 = vmatprep.subr.mxu0 0.0
        %815 = vmatpush1.msra.mxu0 0.0
        %816 = vmatprep.subr.mxu0 0.0
        %817 = vmatpush1.msra.mxu0 0.0
        %818 = vmatprep.subr.mxu0 0.0
        %819 = vmatpush1.msra.mxu0 0.0
        %820 = vmatprep.subr.mxu0 0.0
        %821 = vmatpush1.msra.mxu0 0.0
        %822 = vmatprep.subr.mxu0 0.0
        %823 = vmatpush1.msra.mxu0 0.0
        %824 = vmatprep.subr.mxu0 0.0
        %825 = vmatpush1.msra.mxu0 0.0
        %826 = vmatprep.subr.mxu0 0.0
        %827 = vmatpush1.msra.mxu0 0.0
        %828 = vmatprep.subr.mxu0 0.0
        %829 = vmatpush1.msra.mxu0 0.0
        %830 = vmatprep.subr.mxu0 0.0
        %831 = vmatpush1.msra.mxu0 0.0
        %832 = vmatprep.mubr.f32.mxu0 0.0
        %833 = vmatmul.mubr.f32.gmra.mrb[0].mxu0 %v766
        %v834 = vpop.f32.mrb[0].mxu0
        %v835 = vadd.f32 0.0, %v834
        %v836 = vpop.f32.mrb[0].mxu0
        %837 = vdwg.mxu0
        %839 = vrot.lane.b32.xlu0 %v835, 8
        %v840 = vpop.permute.xlu0 %839
        %vm842 = vcmask 130112
        %843 = vst.msk [vmem:[#allocation2] sm:$0xff] %vm842, %v840
        %844 = vrot.lane.b32.xlu0 %v505, 112
        %v845 = vpop.permute.xlu0 %844
        %846 = vrot.lane.b32.xlu0 %v502, 80
        %v847 = vpop.permute.xlu0 %846
        %v848 = vsel %vm509, %v845, 0
        %v850 = vsel %vm509, %v847, 0
        %852 = vmatprep.subr.mxu0 0.0
        %853 = vmatpush1.xpose.msra.mxu0 %v850
        %854 = vmatprep.subr.mxu0 0.0
        %855 = vmatpush1.xpose.msra.mxu0 0.0
        %856 = vmatprep.subr.mxu0 0.0
        %857 = vmatpush1.xpose.msra.mxu0 0.0
        %858 = vmatprep.subr.mxu0 0.0
        %859 = vmatpush1.xpose.msra.mxu0 0.0
        %860 = vmatprep.subr.mxu0 0.0
        %861 = vmatpush1.xpose.msra.mxu0 0.0
        %862 = vmatprep.subr.mxu0 0.0
        %863 = vmatpush1.xpose.msra.mxu0 0.0
        %864 = vmatprep.subr.mxu0 0.0
        %865 = vmatpush1.xpose.msra.mxu0 0.0
        %866 = vmatprep.subr.mxu0 0.0
        %867 = vmatpush1.xpose.msra.mxu0 0.0
        %868 = vmatprep.subr.mxu0 0.0
        %869 = vmatpush1.xpose.msra.mxu0 0.0
        %870 = vmatprep.subr.mxu0 0.0
        %871 = vmatpush1.xpose.msra.mxu0 0.0
        %872 = vmatprep.subr.mxu0 0.0
        %873 = vmatpush1.xpose.msra.mxu0 0.0
        %874 = vmatprep.subr.mxu0 0.0
        %875 = vmatpush1.xpose.msra.mxu0 0.0
        %876 = vmatprep.subr.mxu0 0.0
        %877 = vmatpush1.xpose.msra.mxu0 0.0
        %878 = vmatprep.subr.mxu0 0.0
        %879 = vmatpush1.xpose.msra.mxu0 0.0
        %880 = vmatprep.subr.mxu0 0.0
        %881 = vmatpush1.xpose.msra.mxu0 0.0
        %882 = vmatprep.subr.mxu0 0.0
        %883 = vmatpush1.xpose.msra.mxu0 0.0
        %884 = vmatprep.subr.mxu0 0.0
        %885 = vmatpush1.xpose.msra.mxu0 0.0
        %886 = vmatprep.subr.mxu0 0.0
        %887 = vmatpush1.xpose.msra.mxu0 0.0
        %888 = vmatprep.subr.mxu0 0.0
        %889 = vmatpush1.xpose.msra.mxu0 0.0
        %890 = vmatprep.subr.mxu0 0.0
        %891 = vmatpush1.xpose.msra.mxu0 0.0
        %892 = vmatprep.subr.mxu0 0.0
        %893 = vmatpush1.xpose.msra.mxu0 0.0
        %894 = vmatprep.subr.mxu0 0.0
        %895 = vmatpush1.xpose.msra.mxu0 0.0
        %896 = vmatprep.subr.mxu0 0.0
        %897 = vmatpush1.xpose.msra.mxu0 0.0
        %898 = vmatprep.subr.mxu0 0.0
        %899 = vmatpush1.xpose.msra.mxu0 0.0
        %900 = vmatprep.subr.mxu0 0.0
        %901 = vmatpush1.xpose.msra.mxu0 0.0
        %902 = vmatprep.subr.mxu0 0.0
        %903 = vmatpush1.xpose.msra.mxu0 0.0
        %904 = vmatprep.subr.mxu0 0.0
        %905 = vmatpush1.xpose.msra.mxu0 0.0
        %906 = vmatprep.subr.mxu0 0.0
        %907 = vmatpush1.xpose.msra.mxu0 0.0
        %908 = vmatprep.subr.mxu0 0.0
        %909 = vmatpush1.xpose.msra.mxu0 0.0
        %910 = vmatprep.subr.mxu0 0.0
        %911 = vmatpush1.xpose.msra.mxu0 0.0
        %912 = vmatprep.subr.mxu0 0.0
        %913 = vmatpush1.xpose.msra.mxu0 0.0
        %914 = vmatprep.subr.mxu0 0.0
        %915 = vmatpush1.xpose.msra.mxu0 0.0
        %916 = vmatprep.mubr.f32.mxu0 0.0
        %917 = vmatmul.mubr.f32.gmra.mrb[0].mxu0 %v848
        %v918 = vpop.f32.mrb[0].mxu0
        %v919 = vadd.f32 0.0, %v918
        %v920 = vpop.f32.mrb[0].mxu0
        %921 = vdwg.mxu0
        %v922 = vsel %vm509, %v919, -inf
        %923 = vmax.xlane.f32.xlu0 %v922
        %v924 = vpop.xlane.xlu0 %923
        %v925 = vsub.f32 %v919, %v924
        %v926 = vmul.f32 %v925, 1.442695
        %v927 = vpow.pop %v926
        %v928 = vsel %vm509, %v927, 0.0
        %929 = vadd.xlane.f32.xlu0 %v928
        %v930 = vpop.xlane.xlu0 %929
        %v931 = vrcp.pop %v930
        %v932 = vmul.f32 %v927, %v931
        %933 = vrot.lane.b32.xlu0 %v502, 48
        %v934 = vpop.permute.xlu0 %933
        %v937 = vsel %vm509, %v932, 0
        %939 = vmatprep.subr.mxu0 0.0
        %940 = vmatpush1.msra.mxu0 %v934
        %941 = vmatprep.subr.mxu0 0.0
        %942 = vmatpush1.msra.mxu0 0.0
        %943 = vmatprep.subr.mxu0 0.0
        %944 = vmatpush1.msra.mxu0 0.0
        %945 = vmatprep.subr.mxu0 0.0
        %946 = vmatpush1.msra.mxu0 0.0
        %947 = vmatprep.subr.mxu0 0.0
        %948 = vmatpush1.msra.mxu0 0.0
        %949 = vmatprep.subr.mxu0 0.0
        %950 = vmatpush1.msra.mxu0 0.0
        %951 = vmatprep.subr.mxu0 0.0
        %952 = vmatpush1.msra.mxu0 0.0
        %953 = vmatprep.subr.mxu0 0.0
        %954 = vmatpush1.msra.mxu0 0.0
        %955 = vmatprep.subr.mxu0 0.0
        %956 = vmatpush1.msra.mxu0 0.0
        %957 = vmatprep.subr.mxu0 0.0
        %958 = vmatpush1.msra.mxu0 0.0
        %959 = vmatprep.subr.mxu0 0.0
        %960 = vmatpush1.msra.mxu0 0.0
        %961 = vmatprep.subr.mxu0 0.0
        %962 = vmatpush1.msra.mxu0 0.0
        %963 = vmatprep.subr.mxu0 0.0
        %964 = vmatpush1.msra.mxu0 0.0
        %965 = vmatprep.subr.mxu0 0.0
        %966 = vmatpush1.msra.mxu0 0.0
        %967 = vmatprep.subr.mxu0 0.0
        %968 = vmatpush1.msra.mxu0 0.0
        %969 = vmatprep.subr.mxu0 0.0
        %970 = vmatpush1.msra.mxu0 0.0
        %971 = vmatprep.subr.mxu0 0.0
        %972 = vmatpush1.msra.mxu0 0.0
        %973 = vmatprep.subr.mxu0 0.0
        %974 = vmatpush1.msra.mxu0 0.0
        %975 = vmatprep.subr.mxu0 0.0
        %976 = vmatpush1.msra.mxu0 0.0
        %977 = vmatprep.subr.mxu0 0.0
        %978 = vmatpush1.msra.mxu0 0.0
        %979 = vmatprep.subr.mxu0 0.0
        %980 = vmatpush1.msra.mxu0 0.0
        %981 = vmatprep.subr.mxu0 0.0
        %982 = vmatpush1.msra.mxu0 0.0
        %983 = vmatprep.subr.mxu0 0.0
        %984 = vmatpush1.msra.mxu0 0.0
        %985 = vmatprep.subr.mxu0 0.0
        %986 = vmatpush1.msra.mxu0 0.0
        %987 = vmatprep.subr.mxu0 0.0
        %988 = vmatpush1.msra.mxu0 0.0
        %989 = vmatprep.subr.mxu0 0.0
        %990 = vmatpush1.msra.mxu0 0.0
        %991 = vmatprep.subr.mxu0 0.0
        %992 = vmatpush1.msra.mxu0 0.0
        %993 = vmatprep.subr.mxu0 0.0
        %994 = vmatpush1.msra.mxu0 0.0
        %995 = vmatprep.subr.mxu0 0.0
        %996 = vmatpush1.msra.mxu0 0.0
        %997 = vmatprep.subr.mxu0 0.0
        %998 = vmatpush1.msra.mxu0 0.0
        %999 = vmatprep.subr.mxu0 0.0
        %1000 = vmatpush1.msra.mxu0 0.0
        %1001 = vmatprep.subr.mxu0 0.0
        %1002 = vmatpush1.msra.mxu0 0.0
        %1003 = vmatprep.mubr.f32.mxu0 0.0
        %1004 = vmatmul.mubr.f32.gmra.mrb[0].mxu0 %v937
        %v1005 = vpop.f32.mrb[0].mxu0
        %v1006 = vadd.f32 0.0, %v1005
        %v1007 = vpop.f32.mrb[0].mxu0
        %1008 = vdwg.mxu0
        %1010 = vrot.lane.b32.xlu0 %v1006, 16
        %v1011 = vpop.permute.xlu0 %1010
        %vm1013 = vcmask 195712
        %1014 = vst.msk [vmem:[#allocation2] sm:$0xff] %vm1013, %v1011
        %1015 = vrot.lane.b32.xlu0 %v505, 104
        %v1016 = vpop.permute.xlu0 %1015
        %1017 = vrot.lane.b32.xlu0 %v502, 72
        %v1018 = vpop.permute.xlu0 %1017
        %v1019 = vsel %vm509, %v1016, 0
        %v1021 = vsel %vm509, %v1018, 0
        %1023 = vmatprep.subr.mxu0 0.0
        %1024 = vmatpush1.xpose.msra.mxu0 %v1021
        %1025 = vmatprep.subr.mxu0 0.0
        %1026 = vmatpush1.xpose.msra.mxu0 0.0
        %1027 = vmatprep.subr.mxu0 0.0
        %1028 = vmatpush1.xpose.msra.mxu0 0.0
        %1029 = vmatprep.subr.mxu0 0.0
        %1030 = vmatpush1.xpose.msra.mxu0 0.0
        %1031 = vmatprep.subr.mxu0 0.0
        %1032 = vmatpush1.xpose.msra.mxu0 0.0
        %1033 = vmatprep.subr.mxu0 0.0
        %1034 = vmatpush1.xpose.msra.mxu0 0.0
        %1035 = vmatprep.subr.mxu0 0.0
        %1036 = vmatpush1.xpose.msra.mxu0 0.0
        %1037 = vmatprep.subr.mxu0 0.0
        %1038 = vmatpush1.xpose.msra.mxu0 0.0
        %1039 = vmatprep.subr.mxu0 0.0
        %1040 = vmatpush1.xpose.msra.mxu0 0.0
        %1041 = vmatprep.subr.mxu0 0.0
        %1042 = vmatpush1.xpose.msra.mxu0 0.0
        %1043 = vmatprep.subr.mxu0 0.0
        %1044 = vmatpush1.xpose.msra.mxu0 0.0
        %1045 = vmatprep.subr.mxu0 0.0
        %1046 = vmatpush1.xpose.msra.mxu0 0.0
        %1047 = vmatprep.subr.mxu0 0.0
        %1048 = vmatpush1.xpose.msra.mxu0 0.0
        %1049 = vmatprep.subr.mxu0 0.0
        %1050 = vmatpush1.xpose.msra.mxu0 0.0
        %1051 = vmatprep.subr.mxu0 0.0
        %1052 = vmatpush1.xpose.msra.mxu0 0.0
        %1053 = vmatprep.subr.mxu0 0.0
        %1054 = vmatpush1.xpose.msra.mxu0 0.0
        %1055 = vmatprep.subr.mxu0 0.0
        %1056 = vmatpush1.xpose.msra.mxu0 0.0
        %1057 = vmatprep.subr.mxu0 0.0
        %1058 = vmatpush1.xpose.msra.mxu0 0.0
        %1059 = vmatprep.subr.mxu0 0.0
        %1060 = vmatpush1.xpose.msra.mxu0 0.0
        %1061 = vmatprep.subr.mxu0 0.0
        %1062 = vmatpush1.xpose.msra.mxu0 0.0
        %1063 = vmatprep.subr.mxu0 0.0
        %1064 = vmatpush1.xpose.msra.mxu0 0.0
        %1065 = vmatprep.subr.mxu0 0.0
        %1066 = vmatpush1.xpose.msra.mxu0 0.0
        %1067 = vmatprep.subr.mxu0 0.0
        %1068 = vmatpush1.xpose.msra.mxu0 0.0
        %1069 = vmatprep.subr.mxu0 0.0
        %1070 = vmatpush1.xpose.msra.mxu0 0.0
        %1071 = vmatprep.subr.mxu0 0.0
        %1072 = vmatpush1.xpose.msra.mxu0 0.0
        %1073 = vmatprep.subr.mxu0 0.0
        %1074 = vmatpush1.xpose.msra.mxu0 0.0
        %1075 = vmatprep.subr.mxu0 0.0
        %1076 = vmatpush1.xpose.msra.mxu0 0.0
        %1077 = vmatprep.subr.mxu0 0.0
        %1078 = vmatpush1.xpose.msra.mxu0 0.0
        %1079 = vmatprep.subr.mxu0 0.0
        %1080 = vmatpush1.xpose.msra.mxu0 0.0
        %1081 = vmatprep.subr.mxu0 0.0
        %1082 = vmatpush1.xpose.msra.mxu0 0.0
        %1083 = vmatprep.subr.mxu0 0.0
        %1084 = vmatpush1.xpose.msra.mxu0 0.0
        %1085 = vmatprep.subr.mxu0 0.0
        %1086 = vmatpush1.xpose.msra.mxu0 0.0
        %1087 = vmatprep.mubr.f32.mxu0 0.0
        %1088 = vmatmul.mubr.f32.gmra.mrb[0].mxu0 %v1019
        %v1089 = vpop.f32.mrb[0].mxu0
        %v1090 = vadd.f32 0.0, %v1089
        %v1091 = vpop.f32.mrb[0].mxu0
        %1092 = vdwg.mxu0
        %v1093 = vsel %vm509, %v1090, -inf
        %1094 = vmax.xlane.f32.xlu0 %v1093
        %v1095 = vpop.xlane.xlu0 %1094
        %v1096 = vsub.f32 %v1090, %v1095
        %v1097 = vmul.f32 %v1096, 1.442695
        %v1098 = vpow.pop %v1097
        %v1099 = vsel %vm509, %v1098, 0.0
        %1100 = vadd.xlane.f32.xlu0 %v1099
        %v1101 = vpop.xlane.xlu0 %1100
        %v1102 = vrcp.pop %v1101
        %v1103 = vmul.f32 %v1098, %v1102
        %1104 = vrot.lane.b32.xlu0 %v502, 40
        %v1105 = vpop.permute.xlu0 %1104
        %v1108 = vsel %vm509, %v1103, 0
        %1110 = vmatprep.subr.mxu0 0.0
        %1111 = vmatpush1.msra.mxu0 %v1105
        %1112 = vmatprep.subr.mxu0 0.0
        %1113 = vmatpush1.msra.mxu0 0.0
        %1114 = vmatprep.subr.mxu0 0.0
        %1115 = vmatpush1.msra.mxu0 0.0
        %1116 = vmatprep.subr.mxu0 0.0
        %1117 = vmatpush1.msra.mxu0 0.0
        %1118 = vmatprep.subr.mxu0 0.0
        %1119 = vmatpush1.msra.mxu0 0.0
        %1120 = vmatprep.subr.mxu0 0.0
        %1121 = vmatpush1.msra.mxu0 0.0
        %1122 = vmatprep.subr.mxu0 0.0
        %1123 = vmatpush1.msra.mxu0 0.0
        %1124 = vmatprep.subr.mxu0 0.0
        %1125 = vmatpush1.msra.mxu0 0.0
        %1126 = vmatprep.subr.mxu0 0.0
        %1127 = vmatpush1.msra.mxu0 0.0
        %1128 = vmatprep.subr.mxu0 0.0
        %1129 = vmatpush1.msra.mxu0 0.0
        %1130 = vmatprep.subr.mxu0 0.0
        %1131 = vmatpush1.msra.mxu0 0.0
        %1132 = vmatprep.subr.mxu0 0.0
        %1133 = vmatpush1.msra.mxu0 0.0
        %1134 = vmatprep.subr.mxu0 0.0
        %1135 = vmatpush1.msra.mxu0 0.0
        %1136 = vmatprep.subr.mxu0 0.0
        %1137 = vmatpush1.msra.mxu0 0.0
        %1138 = vmatprep.subr.mxu0 0.0
        %1139 = vmatpush1.msra.mxu0 0.0
        %1140 = vmatprep.subr.mxu0 0.0
        %1141 = vmatpush1.msra.mxu0 0.0
        %1142 = vmatprep.subr.mxu0 0.0
        %1143 = vmatpush1.msra.mxu0 0.0
        %1144 = vmatprep.subr.mxu0 0.0
        %1145 = vmatpush1.msra.mxu0 0.0
        %1146 = vmatprep.subr.mxu0 0.0
        %1147 = vmatpush1.msra.mxu0 0.0
        %1148 = vmatprep.subr.mxu0 0.0
        %1149 = vmatpush1.msra.mxu0 0.0
        %1150 = vmatprep.subr.mxu0 0.0
        %1151 = vmatpush1.msra.mxu0 0.0
        %1152 = vmatprep.subr.mxu0 0.0
        %1153 = vmatpush1.msra.mxu0 0.0
        %1154 = vmatprep.subr.mxu0 0.0
        %1155 = vmatpush1.msra.mxu0 0.0
        %1156 = vmatprep.subr.mxu0 0.0
        %1157 = vmatpush1.msra.mxu0 0.0
        %1158 = vmatprep.subr.mxu0 0.0
        %1159 = vmatpush1.msra.mxu0 0.0
        %1160 = vmatprep.subr.mxu0 0.0
        %1161 = vmatpush1.msra.mxu0 0.0
        %1162 = vmatprep.subr.mxu0 0.0
        %1163 = vmatpush1.msra.mxu0 0.0
        %1164 = vmatprep.subr.mxu0 0.0
        %1165 = vmatpush1.msra.mxu0 0.0
        %1166 = vmatprep.subr.mxu0 0.0
        %1167 = vmatpush1.msra.mxu0 0.0
        %1168 = vmatprep.subr.mxu0 0.0
        %1169 = vmatpush1.msra.mxu0 0.0
        %1170 = vmatprep.subr.mxu0 0.0
        %1171 = vmatpush1.msra.mxu0 0.0
        %1172 = vmatprep.subr.mxu0 0.0
        %1173 = vmatpush1.msra.mxu0 0.0
        %1174 = vmatprep.mubr.f32.mxu0 0.0
        %1175 = vmatmul.mubr.f32.gmra.mrb[0].mxu0 %v1108
        %v1176 = vpop.f32.mrb[0].mxu0
        %v1177 = vadd.f32 0.0, %v1176
        %v1178 = vpop.f32.mrb[0].mxu0
        %1179 = vdwg.mxu0
        %1181 = vrot.lane.b32.xlu0 %v1177, 24
        %v1182 = vpop.permute.xlu0 %1181
        %vm1184 = vcmask 261312
        %1185 = vst.msk [vmem:[#allocation2] sm:$0xff] %vm1184, %v1182
        %v1186 = vld [vmem:[#allocation2] sm:$0xff]
        %v1187 = vld [vmem:[%s4] sm:$0xff]
        %v1188 = vld [vmem:[%s4 + $0x8] sm:$0xff]
        %v1189 = vld [vmem:[%s4 + $0x10] sm:$0xff]
        %v1190 = vld [vmem:[%s4 + $0x18] sm:$0xff]
        %v1192 = vsel %vm399, %v1186, 0
        %1194 = vmatprep.subr.mxu0 0.0
        %1195 = vmatpush1.msra.mxu0 %v1187
        %1196 = vmatprep.subr.mxu0 0.0
        %1197 = vmatpush1.msra.mxu0 %v1188
        %1198 = vmatprep.subr.mxu0 0.0
        %1199 = vmatpush1.msra.mxu0 %v1189
        %1200 = vmatprep.subr.mxu0 0.0
        %1201 = vmatpush1.msra.mxu0 %v1190
        %1202 = vmatprep.subr.mxu0 0.0
        %1203 = vmatpush1.msra.mxu0 0.0
        %1204 = vmatprep.subr.mxu0 0.0
        %1205 = vmatpush1.msra.mxu0 0.0
        %1206 = vmatprep.subr.mxu0 0.0
        %1207 = vmatpush1.msra.mxu0 0.0
        %1208 = vmatprep.subr.mxu0 0.0
        %1209 = vmatpush1.msra.mxu0 0.0
        %1210 = vmatprep.subr.mxu0 0.0
        %1211 = vmatpush1.msra.mxu0 0.0
        %1212 = vmatprep.subr.mxu0 0.0
        %1213 = vmatpush1.msra.mxu0 0.0
        %1214 = vmatprep.subr.mxu0 0.0
        %1215 = vmatpush1.msra.mxu0 0.0
        %1216 = vmatprep.subr.mxu0 0.0
        %1217 = vmatpush1.msra.mxu0 0.0
        %1218 = vmatprep.subr.mxu0 0.0
        %1219 = vmatpush1.msra.mxu0 0.0
        %1220 = vmatprep.subr.mxu0 0.0
        %1221 = vmatpush1.msra.mxu0 0.0
        %1222 = vmatprep.subr.mxu0 0.0
        %1223 = vmatpush1.msra.mxu0 0.0
        %1224 = vmatprep.subr.mxu0 0.0
        %1225 = vmatpush1.msra.mxu0 0.0
        %1226 = vmatprep.subr.mxu0 0.0
        %1227 = vmatpush1.msra.mxu0 0.0
        %1228 = vmatprep.subr.mxu0 0.0
        %1229 = vmatpush1.msra.mxu0 0.0
        %1230 = vmatprep.subr.mxu0 0.0
        %1231 = vmatpush1.msra.mxu0 0.0
        %1232 = vmatprep.subr.mxu0 0.0
        %1233 = vmatpush1.msra.mxu0 0.0
        %1234 = vmatprep.subr.mxu0 0.0
        %1235 = vmatpush1.msra.mxu0 0.0
        %1236 = vmatprep.subr.mxu0 0.0
        %1237 = vmatpush1.msra.mxu0 0.0
        %1238 = vmatprep.subr.mxu0 0.0
        %1239 = vmatpush1.msra.mxu0 0.0
        %1240 = vmatprep.subr.mxu0 0.0
        %1241 = vmatpush1.msra.mxu0 0.0
        %1242 = vmatprep.subr.mxu0 0.0
        %1243 = vmatpush1.msra.mxu0 0.0
        %1244 = vmatprep.subr.mxu0 0.0
        %1245 = vmatpush1.msra.mxu0 0.0
        %1246 = vmatprep.subr.mxu0 0.0
        %1247 = vmatpush1.msra.mxu0 0.0
        %1248 = vmatprep.subr.mxu0 0.0
        %1249 = vmatpush1.msra.mxu0 0.0
        %1250 = vmatprep.subr.mxu0 0.0
        %1251 = vmatpush1.msra.mxu0 0.0
        %1252 = vmatprep.subr.mxu0 0.0
        %1253 = vmatpush1.msra.mxu0 0.0
        %1254 = vmatprep.subr.mxu0 0.0
        %1255 = vmatpush1.msra.mxu0 0.0
        %1256 = vmatprep.subr.mxu0 0.0
        %1257 = vmatpush1.msra.mxu0 0.0
        %1258 = vmatprep.mubr.f32.mxu0 0.0
        %1259 = vmatmul.mubr.f32.gmra.mrb[0].mxu0 %v1192
        %v1260 = vpop.f32.mrb[0].mxu0
        %v1261 = vadd.f32 0.0, %v1260
        %v1262 = vpop.f32.mrb[0].mxu0
        %1263 = vdwg.mxu0
        %v1264 = vadd.f32 %v396, %v1261
        %v1265 = vld [vmem:[%s5] sm:$0x1]
        %v1266 = vld [vmem:[%s6] sm:$0x1]
        %v1267 = vsel %vm399, %v1264, 0.0
        %1268 = vadd.xlane.f32.xlu0 %v1267
        %v1269 = vpop.xlane.xlu0 %1268
        %v1270 = vmul.f32 %v1269, %v403
        %v1271 = vsub.f32 %v1264, %v1270
        %v1272 = vmul.f32 %v1271, %v1271
        %v1273 = vsel %vm399, %v1272, 0.0
        %1274 = vadd.xlane.f32.xlu0 %v1273
        %v1275 = vpop.xlane.xlu0 %1274
        %v1276 = vmul.f32 %v1275, %v403
        %v1277 = vadd.f32 %v1276, 1e-05
        %v1278 = vrsqrt.pop %v1277
        %v1279 = vmul.f32 %v1271, %v1278
        %v1281 = vlaneseq
        %v1282 = vshrl.u32 %v1281, 7
        %v1283 = vsub.s32 0, %v1282
        %v1284 = vrot.slane %v1265, %v1283
        %v1286 = vmul.f32 %v1279, %v1284
        %v1288 = vlaneseq
        %v1289 = vshrl.u32 %v1288, 7
        %v1290 = vsub.s32 0, %v1289
        %v1291 = vrot.slane %v1266, %v1290
        %v1293 = vadd.f32 %v1286, %v1291
        %v1294 = vld [vmem:[%s7] sm:$0xff]
        %v1295 = vld [vmem:[%s7 + $0x8] sm:$0xff]
        %v1296 = vld [vmem:[%s7 + $0x10] sm:$0xff]
        %v1297 = vld [vmem:[%s7 + $0x18] sm:$0xff]
        %v1298 = vld [vmem:[%s8] sm:$0x1]
        %v1300 = vlaneseq
        %v1301 = vshrl.u32 %v1300, 7
        %v1302 = vsub.s32 0, %v1301
        %v1303 = vrot.slane %v1298, %v1302
        %v1306 = vsel %vm399, %v1293, 0
        %1308 = vmatprep.subr.mxu0 0.0
        %1309 = vmatpush1.msra.mxu0 %v1294
        %1310 = vmatprep.subr.mxu0 0.0
        %1311 = vmatpush1.msra.mxu0 %v1295
        %1312 = vmatprep.subr.mxu0 0.0
        %1313 = vmatpush1.msra.mxu0 %v1296
        %1314 = vmatprep.subr.mxu0 0.0
        %1315 = vmatpush1.msra.mxu0 %v1297
        %1316 = vmatprep.subr.mxu0 0.0
        %1317 = vmatpush1.msra.mxu0 0.0
        %1318 = vmatprep.subr.mxu0 0.0
        %1319 = vmatpush1.msra.mxu0 0.0
        %1320 = vmatprep.subr.mxu0 0.0
        %1321 = vmatpush1.msra.mxu0 0.0
        %1322 = vmatprep.subr.mxu0 0.0
        %1323 = vmatpush1.msra.mxu0 0.0
        %1324 = vmatprep.subr.mxu0 0.0
        %1325 = vmatpush1.msra.mxu0 0.0
        %1326 = vmatprep.subr.mxu0 0.0
        %1327 = vmatpush1.msra.mxu0 0.0
        %1328 = vmatprep.subr.mxu0 0.0
        %1329 = vmatpush1.msra.mxu0 0.0
        %1330 = vmatprep.subr.mxu0 0.0
        %1331 = vmatpush1.msra.mxu0 0.0
        %1332 = vmatprep.subr.mxu0 0.0
        %1333 = vmatpush1.msra.mxu0 0.0
        %1334 = vmatprep.subr.mxu0 0.0
        %1335 = vmatpush1.msra.mxu0 0.0
        %1336 = vmatprep.subr.mxu0 0.0
        %1337 = vmatpush1.msra.mxu0 0.0
        %1338 = vmatprep.subr.mxu0 0.0
        %1339 = vmatpush1.msra.mxu0 0.0
        %1340 = vmatprep.subr.mxu0 0.0
        %1341 = vmatpush1.msra.mxu0 0.0
        %1342 = vmatprep.subr.mxu0 0.0
        %1343 = vmatpush1.msra.mxu0 0.0
        %1344 = vmatprep.subr.mxu0 0.0
        %1345 = vmatpush1.msra.mxu0 0.0
        %1346 = vmatprep.subr.mxu0 0.0
        %1347 = vmatpush1.msra.mxu0 0.0
        %1348 = vmatprep.subr.mxu0 0.0
        %1349 = vmatpush1.msra.mxu0 0.0
        %1350 = vmatprep.subr.mxu0 0.0
        %1351 = vmatpush1.msra.mxu0 0.0
        %1352 = vmatprep.subr.mxu0 0.0
        %1353 = vmatpush1.msra.mxu0 0.0
        %1354 = vmatprep.subr.mxu0 0.0
        %1355 = vmatpush1.msra.mxu0 0.0
        %1356 = vmatprep.subr.mxu0 0.0
        %1357 = vmatpush1.msra.mxu0 0.0
        %1358 = vmatprep.subr.mxu0 0.0
        %1359 = vmatpush1.msra.mxu0 0.0
        %1360 = vmatprep.subr.mxu0 0.0
        %1361 = vmatpush1.msra.mxu0 0.0
        %1362 = vmatprep.subr.mxu0 0.0
        %1363 = vmatpush1.msra.mxu0 0.0
        %1364 = vmatprep.subr.mxu0 0.0
        %1365 = vmatpush1.msra.mxu0 0.0
        %1366 = vmatprep.subr.mxu0 0.0
        %1367 = vmatpush1.msra.mxu0 0.0
        %1368 = vmatprep.subr.mxu0 0.0
        %1369 = vmatpush1.msra.mxu0 0.0
        %1370 = vmatprep.subr.mxu0 0.0
        %1371 = vmatpush1.msra.mxu0 0.0
        %1372 = vmatprep.mubr.f32.mxu0 0.0
        %1373 = vmatmul.mubr.f32.gmra.mrb[0].mxu0 %v1306
        %v1374 = vpop.f32.mrb[0].mxu0
        %v1375 = vadd.f32 %v1303, %v1374
        %v1376 = vpop.f32.mrb[0].mxu0
        %1377 = vdwg.mxu0
        %v1378 = vmul.f32 %v1375, 0.5
        %v1379 = vmul.f32 %v1375, 0.70710677
        %v1380 = verf.f32.pop %v1379
        %v1381 = vadd.f32 %v1380, 1.0
        %v1382 = vmul.f32 %v1378, %v1381
        %v1383 = vld [vmem:[%s9] sm:$0xff]
        %v1384 = vld [vmem:[%s9 + $0x8] sm:$0xff]
        %v1385 = vld [vmem:[%s9 + $0x10] sm:$0xff]
        %v1386 = vld [vmem:[%s9 + $0x18] sm:$0xff]
        %v1387 = vld [vmem:[%s9 + $0x20] sm:$0xff]
        %v1388 = vld [vmem:[%s9 + $0x28] sm:$0xff]
        %v1389 = vld [vmem:[%s9 + $0x30] sm:$0xff]
        %v1390 = vld [vmem:[%s9 + $0x38] sm:$0xff]
        %v1391 = vld [vmem:[%s9 + $0x40] sm:$0xff]
        %v1392 = vld [vmem:[%s9 + $0x48] sm:$0xff]
        %v1393 = vld [vmem:[%s9 + $0x50] sm:$0xff]
        %v1394 = vld [vmem:[%s9 + $0x58] sm:$0xff]
        %v1395 = vld [vmem:[%s9 + $0x60] sm:$0xff]
        %v1396 = vld [vmem:[%s9 + $0x68] sm:$0xff]
        %v1397 = vld [vmem:[%s9 + $0x70] sm:$0xff]
        %v1398 = vld [vmem:[%s9 + $0x78] sm:$0xff]
        %v1399 = vld [vmem:[%s10] sm:$0x1]
        %v1401 = vlaneseq
        %v1402 = vshrl.u32 %v1401, 7
        %v1403 = vsub.s32 0, %v1402
        %v1404 = vrot.slane %v1399, %v1403
        %1406 = vmatprep.subr.mxu0 0.0
        %1407 = vmatpush1.msra.mxu0 %v1383
        %1408 = vmatprep.subr.mxu0 0.0
        %1409 = vmatpush1.msra.mxu0 %v1384
        %1410 = vmatprep.subr.mxu0 0.0
        %1411 = vmatpush1.msra.mxu0 %v1385
        %1412 = vmatprep.subr.mxu0 0.0
        %1413 = vmatpush1.msra.mxu0 %v1386
        %1414 = vmatprep.subr.mxu0 0.0
        %1415 = vmatpush1.msra.mxu0 %v1387
        %1416 = vmatprep.subr.mxu0 0.0
        %1417 = vmatpush1.msra.mxu0 %v1388
        %1418 = vmatprep.subr.mxu0 0.0
        %1419 = vmatpush1.msra.mxu0 %v1389
        %1420 = vmatprep.subr.mxu0 0.0
        %1421 = vmatpush1.msra.mxu0 %v1390
        %1422 = vmatprep.subr.mxu0 0.0
        %1423 = vmatpush1.msra.mxu0 %v1391
        %1424 = vmatprep.subr.mxu0 0.0
        %1425 = vmatpush1.msra.mxu0 %v1392
        %1426 = vmatprep.subr.mxu0 0.0
        %1427 = vmatpush1.msra.mxu0 %v1393
        %1428 = vmatprep.subr.mxu0 0.0
        %1429 = vmatpush1.msra.mxu0 %v1394
        %1430 = vmatprep.subr.mxu0 0.0
        %1431 = vmatpush1.msra.mxu0 %v1395
        %1432 = vmatprep.subr.mxu0 0.0
        %1433 = vmatpush1.msra.mxu0 %v1396
        %1434 = vmatprep.subr.mxu0 0.0
        %1435 = vmatpush1.msra.mxu0 %v1397
        %1436 = vmatprep.subr.mxu0 0.0
        %1437 = vmatpush1.msra.mxu0 %v1398
        %1438 = vmatprep.subr.mxu0 0.0
        %1439 = vmatpush1.msra.mxu0 0.0
        %1440 = vmatprep.subr.mxu0 0.0
        %1441 = vmatpush1.msra.mxu0 0.0
        %1442 = vmatprep.subr.mxu0 0.0
        %1443 = vmatpush1.msra.mxu0 0.0
        %1444 = vmatprep.subr.mxu0 0.0
        %1445 = vmatpush1.msra.mxu0 0.0
        %1446 = vmatprep.subr.mxu0 0.0
        %1447 = vmatpush1.msra.mxu0 0.0
        %1448 = vmatprep.subr.mxu0 0.0
        %1449 = vmatpush1.msra.mxu0 0.0
        %1450 = vmatprep.subr.mxu0 0.0
        %1451 = vmatpush1.msra.mxu0 0.0
        %1452 = vmatprep.subr.mxu0 0.0
        %1453 = vmatpush1.msra.mxu0 0.0
        %1454 = vmatprep.subr.mxu0 0.0
        %1455 = vmatpush1.msra.mxu0 0.0
        %1456 = vmatprep.subr.mxu0 0.0
        %1457 = vmatpush1.msra.mxu0 0.0
        %1458 = vmatprep.subr.mxu0 0.0
        %1459 = vmatpush1.msra.mxu0 0.0
        %1460 = vmatprep.subr.mxu0 0.0
        %1461 = vmatpush1.msra.mxu0 0.0
        %1462 = vmatprep.subr.mxu0 0.0
        %1463 = vmatpush1.msra.mxu0 0.0
        %1464 = vmatprep.subr.mxu0 0.0
        %1465 = vmatpush1.msra.mxu0 0.0
        %1466 = vmatprep.subr.mxu0 0.0
        %1467 = vmatpush1.msra.mxu0 0.0
        %1468 = vmatprep.subr.mxu0 0.0
        %1469 = vmatpush1.msra.mxu0 0.0
        %1470 = vmatprep.mubr.f32.mxu0 0.0
        %1471 = vmatmul.mubr.f32.gmra.mrb[0].mxu0 %v1382
        %v1472 = vpop.f32.mrb[0].mxu0
        %v1473 = vadd.f32 %v1404, %v1472
        %v1474 = vpop.f32.mrb[0].mxu0
        %1475 = vdwg.mxu0
        %v1476 = vadd.f32 %v1264, %v1473
        %1477 = vst.msk [vmem:[%s391] sm:$0xff] %vm399, %v1476
        %s1478 = sand.u32 %s283, 1
        %s1479 = scalar_lea.sflag [#allocation4], %s1478
        %s1480 = sand.u32 %s283, 1
        %s1481 = smul.addr %s1480, 8
        %s1482 = scalar_lea.vmem [#allocation3], %s1481
        // Predicated region
        $region65: #{tpu_custom_call.1} parent=63 // pred_check
          %p1483 = pneg %p293
        $region66: #{tpu_custom_call.1} parent=63 // pred_check_branch
          %1485 = sbr.rel (%p1483) target = $region68
        $region67: #{tpu_custom_call.1} parent=63 // pred_region
          %s1487 = ssub.s32 128, 128
          %1488 = vsyncadd %s1479, %s1487
          %s1489 = sadd.s32 %s30, %s29
          %s1490 = smul.addr %s1489, 128
          %s1491 = scalar_lea.hbm %s11, %s1490
          %s1493 = sshll.u32 %s1482, 4
          %s1494 = int_to_ptr.vmem [resolvable:$true] %s1493
          %1496 = dma.vmem_to_hbm [thread:$0]  %s1494, 128, %s1491, %s1479
        $region68: #{tpu_custom_call.1} parent=63 // pred_fallthru
          _
      $region64: #{tpu_custom_call.1} parent=5 // pred_fallthru
        _
      %p1497 = scmp.le.s32.totalorder 2, %s20
      // Predicated region
      $region69: #{tpu_custom_call.1} parent=5 // pred_check
        %p1498 = pneg %p1497
      $region70: #{tpu_custom_call.1} parent=5 // pred_check_branch
        %1500 = sbr.rel (%p1498) target = $region72
      $region71: #{tpu_custom_call.1} parent=5 // pred_region
        %s1501 = ssub.s32 %s20, 2
        // Predicated region
        $region73: #{tpu_custom_call.1} parent=71 // pred_check
          %p1502 = pneg %p299
        $region74: #{tpu_custom_call.1} parent=71 // pred_check_branch
          %1504 = sbr.rel (%p1502) target = $region76
        $region75: #{tpu_custom_call.1} parent=71 // pred_region
          %s1505 = sand.u32 %s284, 1
          %s1506 = scalar_lea.sflag [#allocation4], %s1505
          %s1507 = sand.u32 %s284, 1
          %s1508 = smul.addr %s1507, 8
          %s1509 = scalar_lea.vmem [#allocation3], %s1508
          %1510 = dma.done %s1506, 128
        $region76: #{tpu_custom_call.1} parent=71 // pred_fallthru
          _
      $region72: #{tpu_custom_call.1} parent=5 // pred_fallthru
        _
    $region6: #{tpu_custom_call.1} parent=1 // loop_footer
      %s24 = sadd.s32 1, %s20
    $region7: #{tpu_custom_call.1} parent=1 // loop_footer_branch
      %19 = sbr.rel target = $region3
    $region8: #{tpu_custom_call.1} parent=1 // loop_exit
      _
    %1511 = vsyncpa [#allocation4], 1
    %s1512 = scalar_lea.sflag [#allocation4], 1
    %1513 = vsyncpa %s1512, 1

</llo_original>
